<compile_context>
chip_gen: v5e
topology: v5e:2x2
jax: 0.10.0
libtpu: 0.0.40
codegen_flags: <defaults>
</compile_context>

<pallas_src>
import jax
import jax.numpy as jnp
from jax import lax
from jax.experimental import pallas as pl
from jax.experimental.pallas import tpu as pltpu

# ---- config (small synthetic sizes consistent with the module) ----
VOCAB = 20
PAD_ID = 0
EMB_D = 16       # embedding_layer.embedding_dim
HID_D = 32       # encod_hidden_D
LAT_D = 8        # lat_v_D
BIDIR = True     # bidir_flag

SUBLANE = 8      # f32 sublane tile (batch block)
LAT_PAD = 128    # lane-dense output width


def gru_encoder_kernel(x_ref, wih_bd_ref, bias_cat_ref, whh_bd_ref, bhn_cat_ref,
                       wlin_ref, blin_ref, z_ref, gi_ref):
    """Fused bidirectional GRU encoder block.

    x_ref       : (T, Bp, 2E)  [x_t | x_{T-1-t}] time-major embedded input (f32)
    wih_bd_ref  : (2E, 6H)     block-diag input weights, cols [r_f|z_f|r_b|z_b|n_f|n_b]
    bias_cat_ref: (1, 6H)      [b_ir+b_hr (f), b_iz+b_hz (f), same (b), b_in (f), b_in (b)]
    whh_bd_ref  : (2H, 6H)     block-diag hidden weights, same column order
    bhn_cat_ref : (1, 6H)      b_hn in the n-gate columns, zeros elsewhere
    wlin_ref    : (2H, LAT_PAD), blin_ref: (1, LAT_PAD)
    z_ref       : (Bp, LAT_PAD)
    gi_ref      : VMEM scratch (T, Bp, 6H), lane-dense
    """
    T, Bp, E2 = x_ref.shape
    H6 = whh_bd_ref.shape[1]
    H = H6 // 6
    H2, H4 = 2 * H, 4 * H

    # ---- hoisted input projection: one big MXU call (both directions, all gates) ----
    x_all = x_ref[...].reshape(T * Bp, E2)                               # (T*Bp, 2E)
    gi_all = (jnp.dot(x_all, wih_bd_ref[...],
                      preferred_element_type=jnp.float32)
              + bias_cat_ref[...])                                       # (T*Bp, 6H)
    gi_ref[...] = gi_all.reshape(T, Bp, H6)                              # lane-dense store

    # ---- hoisted weight load / bias broadcast ----
    w_bd = whh_bd_ref[...]                                               # (2H, 6H)
    bhn_bc = jnp.broadcast_to(bhn_cat_ref[...], (Bp, H6))

    def sigmoid_fast(u):
        # 0.5*(1+tanh(0.5*u)) == sigmoid(u); single EUP pass on the critical chain
        return 0.5 * (jnp.tanh(0.5 * u) + 1.0)

    # ---- fused fwd/bwd recurrence: ONE block-diag matmul per timestep ----
    def step(t, h_cat):                                                  # h_cat = [h_f | h_b]
        gh = jnp.dot(h_cat, w_bd, preferred_element_type=jnp.float32) + bhn_bc
        g = gi_ref[t]                                                    # (Bp, 6H)
        rz = sigmoid_fast(g[:, :H4] + gh[:, :H4])                        # [r_f z_f r_b z_b]
        r = jnp.concatenate([rz[:, 0:H], rz[:, H2:H2 + H]], axis=-1)     # [r_f | r_b]
        z = jnp.concatenate([rz[:, H:H2], rz[:, H2 + H:H4]], axis=-1)    # [z_f | z_b]
        n = jnp.tanh(g[:, H4:] + r * gh[:, H4:])                         # [n_f | n_b]
        return (1.0 - z) * n + z * h_cat

    h0 = jnp.zeros((Bp, H2), jnp.float32)
    unroll = True if T <= 16 else 4            # bound the unroll for long sequences
    h_cat = lax.fori_loop(0, T, step, h0, unroll=unroll)

    # h_n[-(1+bidir):] split(1) -> cat(dim=-1) -> squeeze(0)  ==  [h_fwd | h_bwd] = h_cat
    z_ref[...] = (jnp.dot(h_cat, wlin_ref[...], preferred_element_type=jnp.float32)
                  + blin_ref[...])


def init_params(key):
    ks = jax.random.split(key, 12)
    H3 = 3 * HID_D
    bound = 1.0 / jnp.sqrt(HID_D)
    u = lambda k, shape: jax.random.uniform(k, shape, jnp.float32, -bound, bound)
    last_hidden = HID_D * (2 if BIDIR else 1)
    lb = 1.0 / jnp.sqrt(last_hidden)
    return {
        "embedding": jax.random.normal(ks[0], (VOCAB, EMB_D), jnp.float32),
        "w_ih_f": u(ks[1], (H3, EMB_D)),
        "w_hh_f": u(ks[2], (H3, HID_D)),
        "b_ih_f": u(ks[3], (H3,)),
        "b_hh_f": u(ks[4], (H3,)),
        "w_ih_b": u(ks[5], (H3, EMB_D)),
        "w_hh_b": u(ks[6], (H3, HID_D)),
        "b_ih_b": u(ks[7], (H3,)),
        "b_hh_b": u(ks[8], (H3,)),
        "w_lin": jax.random.uniform(ks[9], (LAT_D, last_hidden), jnp.float32, -lb, lb),
        "b_lin": jax.random.uniform(ks[10], (LAT_D,), jnp.float32, -lb, lb),
    }


def encoder_forward(seqs, params):
    """seqs: list of 1-D int32 token arrays (variable length)."""
    # nn.utils.rnn.pad_sequence(batch_first=True, padding_value=pad_id)  -- glue
    B = len(seqs)
    T = max(int(s.shape[0]) for s in seqs)
    padded = jnp.full((B, T), PAD_ID, dtype=jnp.int32)
    for i, s in enumerate(seqs):
        padded = padded.at[i, : s.shape[0]].set(s)

    # embedding lookup (gather) -- glue
    emb = jnp.take(params["embedding"], padded, axis=0)                  # (B, T, E)

    # time-major, batch padded to the 8-row sublane tile; backward half pre-flipped in time
    Bp_blk = SUBLANE
    Bp = ((B + Bp_blk - 1) // Bp_blk) * Bp_blk
    x_tm = jnp.zeros((T, Bp, EMB_D), jnp.float32)
    x_tm = x_tm.at[:, :B, :].set(jnp.transpose(emb, (1, 0, 2)).astype(jnp.float32))
    x_cat = jnp.concatenate([x_tm, x_tm[::-1]], axis=-1)                 # (T, Bp, 2E)

    H = HID_D
    H2, H3, H4, H5, H6 = 2 * H, 3 * H, 4 * H, 5 * H, 6 * H
    E = EMB_D

    # block-diag input-projection weight (2E, 6H); cols [r_f, z_f, r_b, z_b, n_f, n_b]
    wf, wb = params["w_ih_f"], params["w_ih_b"]                          # (3H, E)
    wih_bd = jnp.zeros((2 * E, H6), jnp.float32)
    wih_bd = wih_bd.at[:E, 0:H].set(wf[0:H].T)
    wih_bd = wih_bd.at[:E, H:H2].set(wf[H:H2].T)
    wih_bd = wih_bd.at[:E, H4:H5].set(wf[H2:H3].T)
    wih_bd = wih_bd.at[E:, H2:H3].set(wb[0:H].T)
    wih_bd = wih_bd.at[E:, H3:H4].set(wb[H:H2].T)
    wih_bd = wih_bd.at[E:, H5:H6].set(wb[H2:H3].T)

    bif, bhf = params["b_ih_f"], params["b_hh_f"]
    bib, bhb = params["b_ih_b"], params["b_hh_b"]
    bias_cat = jnp.concatenate([
        bif[0:H] + bhf[0:H], bif[H:H2] + bhf[H:H2],                      # r_f, z_f
        bib[0:H] + bhb[0:H], bib[H:H2] + bhb[H:H2],                      # r_b, z_b
        bif[H2:H3], bib[H2:H3],                                          # n_f, n_b (b_in only)
    ])[None, :]                                                          # (1, 6H)

    # block-diag hidden-to-hidden weight (2H, 6H), same column order
    uf, ub = params["w_hh_f"], params["w_hh_b"]                          # (3H, H)
    whh_bd = jnp.zeros((H2, H6), jnp.float32)
    whh_bd = whh_bd.at[:H, 0:H].set(uf[0:H].T)
    whh_bd = whh_bd.at[:H, H:H2].set(uf[H:H2].T)
    whh_bd = whh_bd.at[:H, H4:H5].set(uf[H2:H3].T)
    whh_bd = whh_bd.at[H:, H2:H3].set(ub[0:H].T)
    whh_bd = whh_bd.at[H:, H3:H4].set(ub[H:H2].T)
    whh_bd = whh_bd.at[H:, H5:H6].set(ub[H2:H3].T)

    # b_hn in the n-gate columns only (added to gh before the r* multiply)
    bhn_cat = jnp.zeros((1, H6), jnp.float32)
    bhn_cat = bhn_cat.at[0, H4:H5].set(bhf[H2:H3])
    bhn_cat = bhn_cat.at[0, H5:H6].set(bhb[H2:H3])

    # final linear padded to 128 output lanes (sliced back after the call)
    wlin_p = jnp.zeros((H2, LAT_PAD), jnp.float32).at[:, :LAT_D].set(params["w_lin"].T)
    blin_p = jnp.zeros((1, LAT_PAD), jnp.float32).at[0, :LAT_D].set(params["b_lin"])

    const = lambda b: (0, 0)
    z_full = pl.pallas_call(
        gru_encoder_kernel,
        out_shape=jax.ShapeDtypeStruct((Bp, LAT_PAD), jnp.float32),
        grid=(Bp // Bp_blk,),
        in_specs=[
            pl.BlockSpec((T, Bp_blk, 2 * E), lambda b: (0, b, 0)),       # activations: tiled
            pl.BlockSpec((2 * E, H6), const),                            # weights: resident
            pl.BlockSpec((1, H6), const),
            pl.BlockSpec((H2, H6), const),
            pl.BlockSpec((1, H6), const),
            pl.BlockSpec((H2, LAT_PAD), const),
            pl.BlockSpec((1, LAT_PAD), const),
        ],
        out_specs=pl.BlockSpec((Bp_blk, LAT_PAD), lambda b: (b, 0)),
        scratch_shapes=[pltpu.VMEM((T, Bp_blk, H6), jnp.float32)],
        compiler_params=pltpu.CompilerParams(
            dimension_semantics=("parallel",)),
    )(x_cat, wih_bd, bias_cat, whh_bd, bhn_cat, wlin_p, blin_p)

    return z_full[:B, :LAT_D], emb


def encoder_reference(emb, params):
    """Pure-JAX reference of the same forward pass (for correctness check)."""
    B, T, _ = emb.shape
    H = HID_D

    def cell(x_t, h, wih, whh, bih, bhh):
        gi = x_t @ wih.T + bih
        gh = h @ whh.T + bhh
        r = jax.nn.sigmoid(gi[:, :H] + gh[:, :H])
        z = jax.nn.sigmoid(gi[:, H:2 * H] + gh[:, H:2 * H])
        n = jnp.tanh(gi[:, 2 * H:] + r * gh[:, 2 * H:])
        return (1.0 - z) * n + z * h

    hf = jnp.zeros((B, H), jnp.float32)
    for t in range(T):
        hf = cell(emb[:, t], hf, params["w_ih_f"], params["w_hh_f"],
                  params["b_ih_f"], params["b_hh_f"])
    hb = jnp.zeros((B, H), jnp.float32)
    for t in range(T - 1, -1, -1):
        hb = cell(emb[:, t], hb, params["w_ih_b"], params["w_hh_b"],
                  params["b_ih_b"], params["b_hh_b"])
    hcat = jnp.concatenate([hf, hb], axis=-1)
    return hcat @ params["w_lin"].T + params["b_lin"]


if __name__ == "__main__":
    key = jax.random.PRNGKey(0)
    pkey, s1, s2 = jax.random.split(key, 3)
    params = init_params(pkey)

    # list of variable-length token sequences (like the PyTorch forward's input)
    seqs = [
        jax.random.randint(s1, (8,), 1, VOCAB, dtype=jnp.int32),
        jax.random.randint(s2, (5,), 1, VOCAB, dtype=jnp.int32),
    ]

    z, emb = encoder_forward(seqs, params)
    z = jax.block_until_ready(z)

    z_ref = encoder_reference(emb, params)
    assert z.shape == (len(seqs), LAT_D)
    # tanh-based sigmoid differs from exp-based sigmoid by ~1 ulp per step -> 1e-4 tol
    assert jnp.allclose(z, z_ref, atol=1e-4, rtol=1e-4), "mismatch vs JAX reference"

    print("KERNEL_OK")
</pallas_src>

<mosaic_0001>
module attributes {stable_mosaic.version = 11 : i64} {
  func.func @gru_encoder_kernel(%arg0: i32, %arg1: memref<8x8x32xf32, #tpu.memory_space<vmem>>, %arg2: memref<32x192xf32, #tpu.memory_space<vmem>>, %arg3: memref<1x192xf32, #tpu.memory_space<vmem>>, %arg4: memref<64x192xf32, #tpu.memory_space<vmem>>, %arg5: memref<1x192xf32, #tpu.memory_space<vmem>>, %arg6: memref<64x128xf32, #tpu.memory_space<vmem>>, %arg7: memref<1x128xf32, #tpu.memory_space<vmem>>, %arg8: memref<8x128xf32, #tpu.memory_space<vmem>>, %arg9: memref<8x8x192xf32, #tpu.memory_space<vmem>>) attributes {dimension_semantics = [#tpu.dimension_semantics<parallel>], iteration_bounds = array<i64: 1>, scalar_prefetch = 0 : i64, scratch_operands = 1 : i64, tpu.core_type = #tpu.core_type<tc>, window_params = [{transform_indices = @transform_0, window_bounds = array<i64: 8, 8, 32>}, {pipeline_mode = #tpu.pipeline_mode<synchronous>, transform_indices = @transform_1, window_bounds = array<i64: 32, 192>}, {pipeline_mode = #tpu.pipeline_mode<synchronous>, transform_indices = @transform_2, window_bounds = array<i64: 1, 192>}, {pipeline_mode = #tpu.pipeline_mode<synchronous>, transform_indices = @transform_3, window_bounds = array<i64: 64, 192>}, {pipeline_mode = #tpu.pipeline_mode<synchronous>, transform_indices = @transform_4, window_bounds = array<i64: 1, 192>}, {pipeline_mode = #tpu.pipeline_mode<synchronous>, transform_indices = @transform_5, window_bounds = array<i64: 64, 128>}, {pipeline_mode = #tpu.pipeline_mode<synchronous>, transform_indices = @transform_6, window_bounds = array<i64: 1, 128>}, {transform_indices = @transform_7, window_bounds = array<i64: 8, 128>}]} {
    %c0 = arith.constant 0 : index
    %c0_0 = arith.constant 0 : index
    %c0_1 = arith.constant 0 : index
    %0 = vector.load %arg1[%c0, %c0_0, %c0_1] : memref<8x8x32xf32, #tpu.memory_space<vmem>>, vector<8x8x32xf32>
    %1 = vector.shape_cast %0 : vector<8x8x32xf32> to vector<64x32xf32>
    %c0_2 = arith.constant 0 : index
    %c0_3 = arith.constant 0 : index
    %2 = vector.load %arg2[%c0_2, %c0_3] : memref<32x192xf32, #tpu.memory_space<vmem>>, vector<32x192xf32>
    %cst = arith.constant dense<0.000000e+00> : vector<64x192xf32>
    %3 = tpu.matmul %1, %2, %cst {dimension_numbers = #tpu.dot_dimension_numbers<[1], [0], [0], [1], [0, 0, 1, 1], [], []>} : vector<64x32xf32>, vector<32x192xf32>, vector<64x192xf32> -> vector<64x192xf32>
    %c0_4 = arith.constant 0 : index
    %c0_5 = arith.constant 0 : index
    %4 = vector.load %arg3[%c0_4, %c0_5] : memref<1x192xf32, #tpu.memory_space<vmem>>, vector<1x192xf32>
    %5 = vector.broadcast %4 : vector<1x192xf32> to vector<64x192xf32>
    %6 = arith.addf %3, %5 : vector<64x192xf32>
    %7 = vector.shape_cast %6 : vector<64x192xf32> to vector<8x8x192xf32>
    %c0_6 = arith.constant 0 : index
    %c0_7 = arith.constant 0 : index
    %c0_8 = arith.constant 0 : index
    %8 = vector.load %arg9[%c0_6, %c0_7, %c0_8] : memref<8x8x192xf32, #tpu.memory_space<vmem>>, vector<8x8x192xf32>
    tpu.vector_store %arg9[%c0_6, %c0_7, %c0_8], %7 {strides = array<i32>} : memref<8x8x192xf32, #tpu.memory_space<vmem>>, vector<8x8x192xf32>,
    %c0_9 = arith.constant 0 : index
    %c0_10 = arith.constant 0 : index
    %9 = vector.load %arg4[%c0_9, %c0_10] : memref<64x192xf32, #tpu.memory_space<vmem>>, vector<64x192xf32>
    %c0_11 = arith.constant 0 : index
    %c0_12 = arith.constant 0 : index
    %10 = vector.load %arg5[%c0_11, %c0_12] : memref<1x192xf32, #tpu.memory_space<vmem>>, vector<1x192xf32>
    %11 = vector.shape_cast %10 : vector<1x192xf32> to vector<1x192xf32>
    %12 = vector.broadcast %11 : vector<1x192xf32> to vector<8x192xf32>
    %cst_13 = arith.constant 0.000000e+00 : f32
    %13 = vector.broadcast %cst_13 : f32 to vector<8x64xf32>
    %c0_i32 = arith.constant 0 : i32
    %cst_14 = arith.constant dense<0.000000e+00> : vector<8x192xf32>
    %14 = tpu.matmul %13, %9, %cst_14 {dimension_numbers = #tpu.dot_dimension_numbers<[1], [0], [0], [1], [0, 0, 1, 1], [], []>} : vector<8x64xf32>, vector<64x192xf32>, vector<8x192xf32> -> vector<8x192xf32>
    %15 = arith.addf %14, %12 : vector<8x192xf32>
    %16 = arith.index_cast %c0_i32 : i32 to index
    %c0_15 = arith.constant 0 : index
    %c0_16 = arith.constant 0 : index
    %17 = vector.load %arg9[%16, %c0_15, %c0_16] : memref<8x8x192xf32, #tpu.memory_space<vmem>>, vector<1x8x192xf32>
    %18 = vector.shape_cast %17 : vector<1x8x192xf32> to vector<8x192xf32>
    %19 = vector.extract_strided_slice %18 {offsets = [0, 0], sizes = [8, 128], strides = [1, 1]} : vector<8x192xf32> to vector<8x128xf32>
    %20 = vector.extract_strided_slice %15 {offsets = [0, 0], sizes = [8, 128], strides = [1, 1]} : vector<8x192xf32> to vector<8x128xf32>
    %21 = arith.addf %19, %20 : vector<8x128xf32>
    %cst_17 = arith.constant 5.000000e-01 : f32
    %22 = vector.broadcast %cst_17 : f32 to vector<8x128xf32>
    %23 = arith.mulf %22, %21 : vector<8x128xf32>
    %24 = math.tanh %23 : vector<8x128xf32>
    %cst_18 = arith.constant 1.000000e+00 : f32
    %25 = vector.broadcast %cst_18 : f32 to vector<8x128xf32>
    %26 = arith.addf %24, %25 : vector<8x128xf32>
    %cst_19 = arith.constant 5.000000e-01 : f32
    %27 = vector.broadcast %cst_19 : f32 to vector<8x128xf32>
    %28 = arith.mulf %27, %26 : vector<8x128xf32>
    %29 = vector.extract_strided_slice %28 {offsets = [0, 0], sizes = [8, 32], strides = [1, 1]} : vector<8x128xf32> to vector<8x32xf32>
    %30 = vector.extract_strided_slice %28 {offsets = [0, 64], sizes = [8, 32], strides = [1, 1]} : vector<8x128xf32> to vector<8x32xf32>
    %31 = tpu.concatenate %29, %30 in 1 : vector<8x32xf32>, vector<8x32xf32> -> vector<8x64xf32>
    %32 = vector.extract_strided_slice %28 {offsets = [0, 32], sizes = [8, 32], strides = [1, 1]} : vector<8x128xf32> to vector<8x32xf32>
    %33 = vector.extract_strided_slice %28 {offsets = [0, 96], sizes = [8, 32], strides = [1, 1]} : vector<8x128xf32> to vector<8x32xf32>
    %34 = tpu.concatenate %32, %33 in 1 : vector<8x32xf32>, vector<8x32xf32> -> vector<8x64xf32>
    %35 = vector.extract_strided_slice %18 {offsets = [0, 128], sizes = [8, 64], strides = [1, 1]} : vector<8x192xf32> to vector<8x64xf32>
    %36 = vector.extract_strided_slice %15 {offsets = [0, 128], sizes = [8, 64], strides = [1, 1]} : vector<8x192xf32> to vector<8x64xf32>
    %37 = arith.mulf %31, %36 : vector<8x64xf32>
    %38 = arith.addf %35, %37 : vector<8x64xf32>
    %39 = math.tanh %38 : vector<8x64xf32>
    %cst_20 = arith.constant 1.000000e+00 : f32
    %40 = vector.broadcast %cst_20 : f32 to vector<8x64xf32>
    %41 = arith.subf %40, %34 : vector<8x64xf32>
    %42 = arith.mulf %41, %39 : vector<8x64xf32>
    %43 = arith.mulf %34, %13 : vector<8x64xf32>
    %44 = arith.addf %42, %43 : vector<8x64xf32>
    %c1_i32 = arith.constant 1 : i32
    %cst_21 = arith.constant dense<0.000000e+00> : vector<8x192xf32>
    %45 = tpu.matmul %44, %9, %cst_21 {dimension_numbers = #tpu.dot_dimension_numbers<[1], [0], [0], [1], [0, 0, 1, 1], [], []>} : vector<8x64xf32>, vector<64x192xf32>, vector<8x192xf32> -> vector<8x192xf32>
    %46 = arith.addf %45, %12 : vector<8x192xf32>
    %47 = arith.index_cast %c1_i32 : i32 to index
    %c0_22 = arith.constant 0 : index
    %c0_23 = arith.constant 0 : index
    %48 = vector.load %arg9[%47, %c0_22, %c0_23] : memref<8x8x192xf32, #tpu.memory_space<vmem>>, vector<1x8x192xf32>
    %49 = vector.shape_cast %48 : vector<1x8x192xf32> to vector<8x192xf32>
    %50 = vector.extract_strided_slice %49 {offsets = [0, 0], sizes = [8, 128], strides = [1, 1]} : vector<8x192xf32> to vector<8x128xf32>
    %51 = vector.extract_strided_slice %46 {offsets = [0, 0], sizes = [8, 128], strides = [1, 1]} : vector<8x192xf32> to vector<8x128xf32>
    %52 = arith.addf %50, %51 : vector<8x128xf32>
    %cst_24 = arith.constant 5.000000e-01 : f32
    %53 = vector.broadcast %cst_24 : f32 to vector<8x128xf32>
    %54 = arith.mulf %53, %52 : vector<8x128xf32>
    %55 = math.tanh %54 : vector<8x128xf32>
    %cst_25 = arith.constant 1.000000e+00 : f32
    %56 = vector.broadcast %cst_25 : f32 to vector<8x128xf32>
    %57 = arith.addf %55, %56 : vector<8x128xf32>
    %cst_26 = arith.constant 5.000000e-01 : f32
    %58 = vector.broadcast %cst_26 : f32 to vector<8x128xf32>
    %59 = arith.mulf %58, %57 : vector<8x128xf32>
    %60 = vector.extract_strided_slice %59 {offsets = [0, 0], sizes = [8, 32], strides = [1, 1]} : vector<8x128xf32> to vector<8x32xf32>
    %61 = vector.extract_strided_slice %59 {offsets = [0, 64], sizes = [8, 32], strides = [1, 1]} : vector<8x128xf32> to vector<8x32xf32>
    %62 = tpu.concatenate %60, %61 in 1 : vector<8x32xf32>, vector<8x32xf32> -> vector<8x64xf32>
    %63 = vector.extract_strided_slice %59 {offsets = [0, 32], sizes = [8, 32], strides = [1, 1]} : vector<8x128xf32> to vector<8x32xf32>
    %64 = vector.extract_strided_slice %59 {offsets = [0, 96], sizes = [8, 32], strides = [1, 1]} : vector<8x128xf32> to vector<8x32xf32>
    %65 = tpu.concatenate %63, %64 in 1 : vector<8x32xf32>, vector<8x32xf32> -> vector<8x64xf32>
    %66 = vector.extract_strided_slice %49 {offsets = [0, 128], sizes = [8, 64], strides = [1, 1]} : vector<8x192xf32> to vector<8x64xf32>
    %67 = vector.extract_strided_slice %46 {offsets = [0, 128], sizes = [8, 64], strides = [1, 1]} : vector<8x192xf32> to vector<8x64xf32>
    %68 = arith.mulf %62, %67 : vector<8x64xf32>
    %69 = arith.addf %66, %68 : vector<8x64xf32>
    %70 = math.tanh %69 : vector<8x64xf32>
    %cst_27 = arith.constant 1.000000e+00 : f32
    %71 = vector.broadcast %cst_27 : f32 to vector<8x64xf32>
    %72 = arith.subf %71, %65 : vector<8x64xf32>
    %73 = arith.mulf %72, %70 : vector<8x64xf32>
    %74 = arith.mulf %65, %44 : vector<8x64xf32>
    %75 = arith.addf %73, %74 : vector<8x64xf32>
    %c2_i32 = arith.constant 2 : i32
    %cst_28 = arith.constant dense<0.000000e+00> : vector<8x192xf32>
    %76 = tpu.matmul %75, %9, %cst_28 {dimension_numbers = #tpu.dot_dimension_numbers<[1], [0], [0], [1], [0, 0, 1, 1], [], []>} : vector<8x64xf32>, vector<64x192xf32>, vector<8x192xf32> -> vector<8x192xf32>
    %77 = arith.addf %76, %12 : vector<8x192xf32>
    %78 = arith.index_cast %c2_i32 : i32 to index
    %c0_29 = arith.constant 0 : index
    %c0_30 = arith.constant 0 : index
    %79 = vector.load %arg9[%78, %c0_29, %c0_30] : memref<8x8x192xf32, #tpu.memory_space<vmem>>, vector<1x8x192xf32>
    %80 = vector.shape_cast %79 : vector<1x8x192xf32> to vector<8x192xf32>
    %81 = vector.extract_strided_slice %80 {offsets = [0, 0], sizes = [8, 128], strides = [1, 1]} : vector<8x192xf32> to vector<8x128xf32>
    %82 = vector.extract_strided_slice %77 {offsets = [0, 0], sizes = [8, 128], strides = [1, 1]} : vector<8x192xf32> to vector<8x128xf32>
    %83 = arith.addf %81, %82 : vector<8x128xf32>
    %cst_31 = arith.constant 5.000000e-01 : f32
    %84 = vector.broadcast %cst_31 : f32 to vector<8x128xf32>
    %85 = arith.mulf %84, %83 : vector<8x128xf32>
    %86 = math.tanh %85 : vector<8x128xf32>
    %cst_32 = arith.constant 1.000000e+00 : f32
    %87 = vector.broadcast %cst_32 : f32 to vector<8x128xf32>
    %88 = arith.addf %86, %87 : vector<8x128xf32>
    %cst_33 = arith.constant 5.000000e-01 : f32
    %89 = vector.broadcast %cst_33 : f32 to vector<8x128xf32>
    %90 = arith.mulf %89, %88 : vector<8x128xf32>
    %91 = vector.extract_strided_slice %90 {offsets = [0, 0], sizes = [8, 32], strides = [1, 1]} : vector<8x128xf32> to vector<8x32xf32>
    %92 = vector.extract_strided_slice %90 {offsets = [0, 64], sizes = [8, 32], strides = [1, 1]} : vector<8x128xf32> to vector<8x32xf32>
    %93 = tpu.concatenate %91, %92 in 1 : vector<8x32xf32>, vector<8x32xf32> -> vector<8x64xf32>
    %94 = vector.extract_strided_slice %90 {offsets = [0, 32], sizes = [8, 32], strides = [1, 1]} : vector<8x128xf32> to vector<8x32xf32>
    %95 = vector.extract_strided_slice %90 {offsets = [0, 96], sizes = [8, 32], strides = [1, 1]} : vector<8x128xf32> to vector<8x32xf32>
    %96 = tpu.concatenate %94, %95 in 1 : vector<8x32xf32>, vector<8x32xf32> -> vector<8x64xf32>
    %97 = vector.extract_strided_slice %80 {offsets = [0, 128], sizes = [8, 64], strides = [1, 1]} : vector<8x192xf32> to vector<8x64xf32>
    %98 = vector.extract_strided_slice %77 {offsets = [0, 128], sizes = [8, 64], strides = [1, 1]} : vector<8x192xf32> to vector<8x64xf32>
    %99 = arith.mulf %93, %98 : vector<8x64xf32>
    %100 = arith.addf %97, %99 : vector<8x64xf32>
    %101 = math.tanh %100 : vector<8x64xf32>
    %cst_34 = arith.constant 1.000000e+00 : f32
    %102 = vector.broadcast %cst_34 : f32 to vector<8x64xf32>
    %103 = arith.subf %102, %96 : vector<8x64xf32>
    %104 = arith.mulf %103, %101 : vector<8x64xf32>
    %105 = arith.mulf %96, %75 : vector<8x64xf32>
    %106 = arith.addf %104, %105 : vector<8x64xf32>
    %c3_i32 = arith.constant 3 : i32
    %cst_35 = arith.constant dense<0.000000e+00> : vector<8x192xf32>
    %107 = tpu.matmul %106, %9, %cst_35 {dimension_numbers = #tpu.dot_dimension_numbers<[1], [0], [0], [1], [0, 0, 1, 1], [], []>} : vector<8x64xf32>, vector<64x192xf32>, vector<8x192xf32> -> vector<8x192xf32>
    %108 = arith.addf %107, %12 : vector<8x192xf32>
    %109 = arith.index_cast %c3_i32 : i32 to index
    %c0_36 = arith.constant 0 : index
    %c0_37 = arith.constant 0 : index
    %110 = vector.load %arg9[%109, %c0_36, %c0_37] : memref<8x8x192xf32, #tpu.memory_space<vmem>>, vector<1x8x192xf32>
    %111 = vector.shape_cast %110 : vector<1x8x192xf32> to vector<8x192xf32>
    %112 = vector.extract_strided_slice %111 {offsets = [0, 0], sizes = [8, 128], strides = [1, 1]} : vector<8x192xf32> to vector<8x128xf32>
    %113 = vector.extract_strided_slice %108 {offsets = [0, 0], sizes = [8, 128], strides = [1, 1]} : vector<8x192xf32> to vector<8x128xf32>
    %114 = arith.addf %112, %113 : vector<8x128xf32>
    %cst_38 = arith.constant 5.000000e-01 : f32
    %115 = vector.broadcast %cst_38 : f32 to vector<8x128xf32>
    %116 = arith.mulf %115, %114 : vector<8x128xf32>
    %117 = math.tanh %116 : vector<8x128xf32>
    %cst_39 = arith.constant 1.000000e+00 : f32
    %118 = vector.broadcast %cst_39 : f32 to vector<8x128xf32>
    %119 = arith.addf %117, %118 : vector<8x128xf32>
    %cst_40 = arith.constant 5.000000e-01 : f32
    %120 = vector.broadcast %cst_40 : f32 to vector<8x128xf32>
    %121 = arith.mulf %120, %119 : vector<8x128xf32>
    %122 = vector.extract_strided_slice %121 {offsets = [0, 0], sizes = [8, 32], strides = [1, 1]} : vector<8x128xf32> to vector<8x32xf32>
    %123 = vector.extract_strided_slice %121 {offsets = [0, 64], sizes = [8, 32], strides = [1, 1]} : vector<8x128xf32> to vector<8x32xf32>
    %124 = tpu.concatenate %122, %123 in 1 : vector<8x32xf32>, vector<8x32xf32> -> vector<8x64xf32>
    %125 = vector.extract_strided_slice %121 {offsets = [0, 32], sizes = [8, 32], strides = [1, 1]} : vector<8x128xf32> to vector<8x32xf32>
    %126 = vector.extract_strided_slice %121 {offsets = [0, 96], sizes = [8, 32], strides = [1, 1]} : vector<8x128xf32> to vector<8x32xf32>
    %127 = tpu.concatenate %125, %126 in 1 : vector<8x32xf32>, vector<8x32xf32> -> vector<8x64xf32>
    %128 = vector.extract_strided_slice %111 {offsets = [0, 128], sizes = [8, 64], strides = [1, 1]} : vector<8x192xf32> to vector<8x64xf32>
    %129 = vector.extract_strided_slice %108 {offsets = [0, 128], sizes = [8, 64], strides = [1, 1]} : vector<8x192xf32> to vector<8x64xf32>
    %130 = arith.mulf %124, %129 : vector<8x64xf32>
    %131 = arith.addf %128, %130 : vector<8x64xf32>
    %132 = math.tanh %131 : vector<8x64xf32>
    %cst_41 = arith.constant 1.000000e+00 : f32
    %133 = vector.broadcast %cst_41 : f32 to vector<8x64xf32>
    %134 = arith.subf %133, %127 : vector<8x64xf32>
    %135 = arith.mulf %134, %132 : vector<8x64xf32>
    %136 = arith.mulf %127, %106 : vector<8x64xf32>
    %137 = arith.addf %135, %136 : vector<8x64xf32>
    %c4_i32 = arith.constant 4 : i32
    %cst_42 = arith.constant dense<0.000000e+00> : vector<8x192xf32>
    %138 = tpu.matmul %137, %9, %cst_42 {dimension_numbers = #tpu.dot_dimension_numbers<[1], [0], [0], [1], [0, 0, 1, 1], [], []>} : vector<8x64xf32>, vector<64x192xf32>, vector<8x192xf32> -> vector<8x192xf32>
    %139 = arith.addf %138, %12 : vector<8x192xf32>
    %140 = arith.index_cast %c4_i32 : i32 to index
    %c0_43 = arith.constant 0 : index
    %c0_44 = arith.constant 0 : index
    %141 = vector.load %arg9[%140, %c0_43, %c0_44] : memref<8x8x192xf32, #tpu.memory_space<vmem>>, vector<1x8x192xf32>
    %142 = vector.shape_cast %141 : vector<1x8x192xf32> to vector<8x192xf32>
    %143 = vector.extract_strided_slice %142 {offsets = [0, 0], sizes = [8, 128], strides = [1, 1]} : vector<8x192xf32> to vector<8x128xf32>
    %144 = vector.extract_strided_slice %139 {offsets = [0, 0], sizes = [8, 128], strides = [1, 1]} : vector<8x192xf32> to vector<8x128xf32>
    %145 = arith.addf %143, %144 : vector<8x128xf32>
    %cst_45 = arith.constant 5.000000e-01 : f32
    %146 = vector.broadcast %cst_45 : f32 to vector<8x128xf32>
    %147 = arith.mulf %146, %145 : vector<8x128xf32>
    %148 = math.tanh %147 : vector<8x128xf32>
    %cst_46 = arith.constant 1.000000e+00 : f32
    %149 = vector.broadcast %cst_46 : f32 to vector<8x128xf32>
    %150 = arith.addf %148, %149 : vector<8x128xf32>
    %cst_47 = arith.constant 5.000000e-01 : f32
    %151 = vector.broadcast %cst_47 : f32 to vector<8x128xf32>
    %152 = arith.mulf %151, %150 : vector<8x128xf32>
    %153 = vector.extract_strided_slice %152 {offsets = [0, 0], sizes = [8, 32], strides = [1, 1]} : vector<8x128xf32> to vector<8x32xf32>
    %154 = vector.extract_strided_slice %152 {offsets = [0, 64], sizes = [8, 32], strides = [1, 1]} : vector<8x128xf32> to vector<8x32xf32>
    %155 = tpu.concatenate %153, %154 in 1 : vector<8x32xf32>, vector<8x32xf32> -> vector<8x64xf32>
    %156 = vector.extract_strided_slice %152 {offsets = [0, 32], sizes = [8, 32], strides = [1, 1]} : vector<8x128xf32> to vector<8x32xf32>
    %157 = vector.extract_strided_slice %152 {offsets = [0, 96], sizes = [8, 32], strides = [1, 1]} : vector<8x128xf32> to vector<8x32xf32>
    %158 = tpu.concatenate %156, %157 in 1 : vector<8x32xf32>, vector<8x32xf32> -> vector<8x64xf32>
    %159 = vector.extract_strided_slice %142 {offsets = [0, 128], sizes = [8, 64], strides = [1, 1]} : vector<8x192xf32> to vector<8x64xf32>
    %160 = vector.extract_strided_slice %139 {offsets = [0, 128], sizes = [8, 64], strides = [1, 1]} : vector<8x192xf32> to vector<8x64xf32>
    %161 = arith.mulf %155, %160 : vector<8x64xf32>
    %162 = arith.addf %159, %161 : vector<8x64xf32>
    %163 = math.tanh %162 : vector<8x64xf32>
    %cst_48 = arith.constant 1.000000e+00 : f32
    %164 = vector.broadcast %cst_48 : f32 to vector<8x64xf32>
    %165 = arith.subf %164, %158 : vector<8x64xf32>
    %166 = arith.mulf %165, %163 : vector<8x64xf32>
    %167 = arith.mulf %158, %137 : vector<8x64xf32>
    %168 = arith.addf %166, %167 : vector<8x64xf32>
    %c5_i32 = arith.constant 5 : i32
    %cst_49 = arith.constant dense<0.000000e+00> : vector<8x192xf32>
    %169 = tpu.matmul %168, %9, %cst_49 {dimension_numbers = #tpu.dot_dimension_numbers<[1], [0], [0], [1], [0, 0, 1, 1], [], []>} : vector<8x64xf32>, vector<64x192xf32>, vector<8x192xf32> -> vector<8x192xf32>
    %170 = arith.addf %169, %12 : vector<8x192xf32>
    %171 = arith.index_cast %c5_i32 : i32 to index
    %c0_50 = arith.constant 0 : index
    %c0_51 = arith.constant 0 : index
    %172 = vector.load %arg9[%171, %c0_50, %c0_51] : memref<8x8x192xf32, #tpu.memory_space<vmem>>, vector<1x8x192xf32>
    %173 = vector.shape_cast %172 : vector<1x8x192xf32> to vector<8x192xf32>
    %174 = vector.extract_strided_slice %173 {offsets = [0, 0], sizes = [8, 128], strides = [1, 1]} : vector<8x192xf32> to vector<8x128xf32>
    %175 = vector.extract_strided_slice %170 {offsets = [0, 0], sizes = [8, 128], strides = [1, 1]} : vector<8x192xf32> to vector<8x128xf32>
    %176 = arith.addf %174, %175 : vector<8x128xf32>
    %cst_52 = arith.constant 5.000000e-01 : f32
    %177 = vector.broadcast %cst_52 : f32 to vector<8x128xf32>
    %178 = arith.mulf %177, %176 : vector<8x128xf32>
    %179 = math.tanh %178 : vector<8x128xf32>
    %cst_53 = arith.constant 1.000000e+00 : f32
    %180 = vector.broadcast %cst_53 : f32 to vector<8x128xf32>
    %181 = arith.addf %179, %180 : vector<8x128xf32>
    %cst_54 = arith.constant 5.000000e-01 : f32
    %182 = vector.broadcast %cst_54 : f32 to vector<8x128xf32>
    %183 = arith.mulf %182, %181 : vector<8x128xf32>
    %184 = vector.extract_strided_slice %183 {offsets = [0, 0], sizes = [8, 32], strides = [1, 1]} : vector<8x128xf32> to vector<8x32xf32>
    %185 = vector.extract_strided_slice %183 {offsets = [0, 64], sizes = [8, 32], strides = [1, 1]} : vector<8x128xf32> to vector<8x32xf32>
    %186 = tpu.concatenate %184, %185 in 1 : vector<8x32xf32>, vector<8x32xf32> -> vector<8x64xf32>
    %187 = vector.extract_strided_slice %183 {offsets = [0, 32], sizes = [8, 32], strides = [1, 1]} : vector<8x128xf32> to vector<8x32xf32>
    %188 = vector.extract_strided_slice %183 {offsets = [0, 96], sizes = [8, 32], strides = [1, 1]} : vector<8x128xf32> to vector<8x32xf32>
    %189 = tpu.concatenate %187, %188 in 1 : vector<8x32xf32>, vector<8x32xf32> -> vector<8x64xf32>
    %190 = vector.extract_strided_slice %173 {offsets = [0, 128], sizes = [8, 64], strides = [1, 1]} : vector<8x192xf32> to vector<8x64xf32>
    %191 = vector.extract_strided_slice %170 {offsets = [0, 128], sizes = [8, 64], strides = [1, 1]} : vector<8x192xf32> to vector<8x64xf32>
    %192 = arith.mulf %186, %191 : vector<8x64xf32>
    %193 = arith.addf %190, %192 : vector<8x64xf32>
    %194 = math.tanh %193 : vector<8x64xf32>
    %cst_55 = arith.constant 1.000000e+00 : f32
    %195 = vector.broadcast %cst_55 : f32 to vector<8x64xf32>
    %196 = arith.subf %195, %189 : vector<8x64xf32>
    %197 = arith.mulf %196, %194 : vector<8x64xf32>
    %198 = arith.mulf %189, %168 : vector<8x64xf32>
    %199 = arith.addf %197, %198 : vector<8x64xf32>
    %c6_i32 = arith.constant 6 : i32
    %cst_56 = arith.constant dense<0.000000e+00> : vector<8x192xf32>
    %200 = tpu.matmul %199, %9, %cst_56 {dimension_numbers = #tpu.dot_dimension_numbers<[1], [0], [0], [1], [0, 0, 1, 1], [], []>} : vector<8x64xf32>, vector<64x192xf32>, vector<8x192xf32> -> vector<8x192xf32>
    %201 = arith.addf %200, %12 : vector<8x192xf32>
    %202 = arith.index_cast %c6_i32 : i32 to index
    %c0_57 = arith.constant 0 : index
    %c0_58 = arith.constant 0 : index
    %203 = vector.load %arg9[%202, %c0_57, %c0_58] : memref<8x8x192xf32, #tpu.memory_space<vmem>>, vector<1x8x192xf32>
    %204 = vector.shape_cast %203 : vector<1x8x192xf32> to vector<8x192xf32>
    %205 = vector.extract_strided_slice %204 {offsets = [0, 0], sizes = [8, 128], strides = [1, 1]} : vector<8x192xf32> to vector<8x128xf32>
    %206 = vector.extract_strided_slice %201 {offsets = [0, 0], sizes = [8, 128], strides = [1, 1]} : vector<8x192xf32> to vector<8x128xf32>
    %207 = arith.addf %205, %206 : vector<8x128xf32>
    %cst_59 = arith.constant 5.000000e-01 : f32
    %208 = vector.broadcast %cst_59 : f32 to vector<8x128xf32>
    %209 = arith.mulf %208, %207 : vector<8x128xf32>
    %210 = math.tanh %209 : vector<8x128xf32>
    %cst_60 = arith.constant 1.000000e+00 : f32
    %211 = vector.broadcast %cst_60 : f32 to vector<8x128xf32>
    %212 = arith.addf %210, %211 : vector<8x128xf32>
    %cst_61 = arith.constant 5.000000e-01 : f32
    %213 = vector.broadcast %cst_61 : f32 to vector<8x128xf32>
    %214 = arith.mulf %213, %212 : vector<8x128xf32>
    %215 = vector.extract_strided_slice %214 {offsets = [0, 0], sizes = [8, 32], strides = [1, 1]} : vector<8x128xf32> to vector<8x32xf32>
    %216 = vector.extract_strided_slice %214 {offsets = [0, 64], sizes = [8, 32], strides = [1, 1]} : vector<8x128xf32> to vector<8x32xf32>
    %217 = tpu.concatenate %215, %216 in 1 : vector<8x32xf32>, vector<8x32xf32> -> vector<8x64xf32>
    %218 = vector.extract_strided_slice %214 {offsets = [0, 32], sizes = [8, 32], strides = [1, 1]} : vector<8x128xf32> to vector<8x32xf32>
    %219 = vector.extract_strided_slice %214 {offsets = [0, 96], sizes = [8, 32], strides = [1, 1]} : vector<8x128xf32> to vector<8x32xf32>
    %220 = tpu.concatenate %218, %219 in 1 : vector<8x32xf32>, vector<8x32xf32> -> vector<8x64xf32>
    %221 = vector.extract_strided_slice %204 {offsets = [0, 128], sizes = [8, 64], strides = [1, 1]} : vector<8x192xf32> to vector<8x64xf32>
    %222 = vector.extract_strided_slice %201 {offsets = [0, 128], sizes = [8, 64], strides = [1, 1]} : vector<8x192xf32> to vector<8x64xf32>
    %223 = arith.mulf %217, %222 : vector<8x64xf32>
    %224 = arith.addf %221, %223 : vector<8x64xf32>
    %225 = math.tanh %224 : vector<8x64xf32>
    %cst_62 = arith.constant 1.000000e+00 : f32
    %226 = vector.broadcast %cst_62 : f32 to vector<8x64xf32>
    %227 = arith.subf %226, %220 : vector<8x64xf32>
    %228 = arith.mulf %227, %225 : vector<8x64xf32>
    %229 = arith.mulf %220, %199 : vector<8x64xf32>
    %230 = arith.addf %228, %229 : vector<8x64xf32>
    %c7_i32 = arith.constant 7 : i32
    %cst_63 = arith.constant dense<0.000000e+00> : vector<8x192xf32>
    %231 = tpu.matmul %230, %9, %cst_63 {dimension_numbers = #tpu.dot_dimension_numbers<[1], [0], [0], [1], [0, 0, 1, 1], [], []>} : vector<8x64xf32>, vector<64x192xf32>, vector<8x192xf32> -> vector<8x192xf32>
    %232 = arith.addf %231, %12 : vector<8x192xf32>
    %233 = arith.index_cast %c7_i32 : i32 to index
    %c0_64 = arith.constant 0 : index
    %c0_65 = arith.constant 0 : index
    %234 = vector.load %arg9[%233, %c0_64, %c0_65] : memref<8x8x192xf32, #tpu.memory_space<vmem>>, vector<1x8x192xf32>
    %235 = vector.shape_cast %234 : vector<1x8x192xf32> to vector<8x192xf32>
    %236 = vector.extract_strided_slice %235 {offsets = [0, 0], sizes = [8, 128], strides = [1, 1]} : vector<8x192xf32> to vector<8x128xf32>
    %237 = vector.extract_strided_slice %232 {offsets = [0, 0], sizes = [8, 128], strides = [1, 1]} : vector<8x192xf32> to vector<8x128xf32>
    %238 = arith.addf %236, %237 : vector<8x128xf32>
    %cst_66 = arith.constant 5.000000e-01 : f32
    %239 = vector.broadcast %cst_66 : f32 to vector<8x128xf32>
    %240 = arith.mulf %239, %238 : vector<8x128xf32>
    %241 = math.tanh %240 : vector<8x128xf32>
    %cst_67 = arith.constant 1.000000e+00 : f32
    %242 = vector.broadcast %cst_67 : f32 to vector<8x128xf32>
    %243 = arith.addf %241, %242 : vector<8x128xf32>
    %cst_68 = arith.constant 5.000000e-01 : f32
    %244 = vector.broadcast %cst_68 : f32 to vector<8x128xf32>
    %245 = arith.mulf %244, %243 : vector<8x128xf32>
    %246 = vector.extract_strided_slice %245 {offsets = [0, 0], sizes = [8, 32], strides = [1, 1]} : vector<8x128xf32> to vector<8x32xf32>
    %247 = vector.extract_strided_slice %245 {offsets = [0, 64], sizes = [8, 32], strides = [1, 1]} : vector<8x128xf32> to vector<8x32xf32>
    %248 = tpu.concatenate %246, %247 in 1 : vector<8x32xf32>, vector<8x32xf32> -> vector<8x64xf32>
    %249 = vector.extract_strided_slice %245 {offsets = [0, 32], sizes = [8, 32], strides = [1, 1]} : vector<8x128xf32> to vector<8x32xf32>
    %250 = vector.extract_strided_slice %245 {offsets = [0, 96], sizes = [8, 32], strides = [1, 1]} : vector<8x128xf32> to vector<8x32xf32>
    %251 = tpu.concatenate %249, %250 in 1 : vector<8x32xf32>, vector<8x32xf32> -> vector<8x64xf32>
    %252 = vector.extract_strided_slice %235 {offsets = [0, 128], sizes = [8, 64], strides = [1, 1]} : vector<8x192xf32> to vector<8x64xf32>
    %253 = vector.extract_strided_slice %232 {offsets = [0, 128], sizes = [8, 64], strides = [1, 1]} : vector<8x192xf32> to vector<8x64xf32>
    %254 = arith.mulf %248, %253 : vector<8x64xf32>
    %255 = arith.addf %252, %254 : vector<8x64xf32>
    %256 = math.tanh %255 : vector<8x64xf32>
    %cst_69 = arith.constant 1.000000e+00 : f32
    %257 = vector.broadcast %cst_69 : f32 to vector<8x64xf32>
    %258 = arith.subf %257, %251 : vector<8x64xf32>
    %259 = arith.mulf %258, %256 : vector<8x64xf32>
    %260 = arith.mulf %251, %230 : vector<8x64xf32>
    %261 = arith.addf %259, %260 : vector<8x64xf32>
    %c8_i32 = arith.constant 8 : i32
    %c0_70 = arith.constant 0 : index
    %c0_71 = arith.constant 0 : index
    %262 = vector.load %arg6[%c0_70, %c0_71] : memref<64x128xf32, #tpu.memory_space<vmem>>, vector<64x128xf32>
    %cst_72 = arith.constant dense<0.000000e+00> : vector<8x128xf32>
    %263 = tpu.matmul %261, %262, %cst_72 {dimension_numbers = #tpu.dot_dimension_numbers<[1], [0], [0], [1], [0, 0, 1, 1], [], []>} : vector<8x64xf32>, vector<64x128xf32>, vector<8x128xf32> -> vector<8x128xf32>
    %c0_73 = arith.constant 0 : index
    %c0_74 = arith.constant 0 : index
    %264 = vector.load %arg7[%c0_73, %c0_74] : memref<1x128xf32, #tpu.memory_space<vmem>>, vector<1x128xf32>
    %265 = vector.broadcast %264 : vector<1x128xf32> to vector<8x128xf32>
    %266 = arith.addf %263, %265 : vector<8x128xf32>
    %c0_75 = arith.constant 0 : index
    %c0_76 = arith.constant 0 : index
    %267 = vector.load %arg8[%c0_75, %c0_76] : memref<8x128xf32, #tpu.memory_space<vmem>>, vector<8x128xf32>
    tpu.vector_store %arg8[%c0_75, %c0_76], %266 {strides = array<i32>} : memref<8x128xf32, #tpu.memory_space<vmem>>, vector<8x128xf32>,
    return
  }
  func.func @transform_0(%arg0: i32) -> (i32, i32, i32) {
    %c0_i32 = arith.constant 0 : i32
    %c0_i32_0 = arith.constant 0 : i32
    %c0_i32_1 = arith.constant 0 : i32
    return %c0_i32, %arg0, %c0_i32_0 : i32, i32, i32
  }
  func.func @transform_1(%arg0: i32) -> (i32, i32) {
    %c0_i32 = arith.constant 0 : i32
    %c0_i32_0 = arith.constant 0 : i32
    %c0_i32_1 = arith.constant 0 : i32
    return %c0_i32, %c0_i32_0 : i32, i32
  }
  func.func @transform_2(%arg0: i32) -> (i32, i32) {
    %c0_i32 = arith.constant 0 : i32
    %c0_i32_0 = arith.constant 0 : i32
    %c0_i32_1 = arith.constant 0 : i32
    return %c0_i32, %c0_i32_0 : i32, i32
  }
  func.func @transform_3(%arg0: i32) -> (i32, i32) {
    %c0_i32 = arith.constant 0 : i32
    %c0_i32_0 = arith.constant 0 : i32
    %c0_i32_1 = arith.constant 0 : i32
    return %c0_i32, %c0_i32_0 : i32, i32
  }
  func.func @transform_4(%arg0: i32) -> (i32, i32) {
    %c0_i32 = arith.constant 0 : i32
    %c0_i32_0 = arith.constant 0 : i32
    %c0_i32_1 = arith.constant 0 : i32
    return %c0_i32, %c0_i32_0 : i32, i32
  }
  func.func @transform_5(%arg0: i32) -> (i32, i32) {
    %c0_i32 = arith.constant 0 : i32
    %c0_i32_0 = arith.constant 0 : i32
    %c0_i32_1 = arith.constant 0 : i32
    return %c0_i32, %c0_i32_0 : i32, i32
  }
  func.func @transform_6(%arg0: i32) -> (i32, i32) {
    %c0_i32 = arith.constant 0 : i32
    %c0_i32_0 = arith.constant 0 : i32
    %c0_i32_1 = arith.constant 0 : i32
    return %c0_i32, %c0_i32_0 : i32, i32
  }
  func.func @transform_7(%arg0: i32) -> (i32, i32) {
    %c0_i32 = arith.constant 0 : i32
    %c0_i32_0 = arith.constant 0 : i32
    return %arg0, %c0_i32 : i32, i32
  }
}

</mosaic_0001>

<llo_original>
// kernel: tpu_custom_call.1
$region0: #{tpu_custom_call.1}
  #allocation0 [shape = 'u32[]', space=smem, size = 0x4, offset = 0x4, fixed_abs, tag = 'smem constant byte address 0x4 - core index']
  #allocation1 [shape = 'u32[72,128]{1,0:T(1,128)}', space=vmem, size = 0x9000, scoped, tag = 'internal scratch']
  #allocation2 [shape = 'f32[8,8,192]{2,1,0:T(8,128)}', space=vmem, size = 0x10000, scoped, tag = 'scratch operand']
  %s0 = inlined_call_operand.hbm [shape: f32[8,8,32], index: 0, kind: input, shape index: {}]
  %s1 = inlined_call_operand.hbm [shape: f32[32,192], index: 1, kind: input, shape index: {}]
  %s2 = inlined_call_operand.hbm [shape: f32[1,192], index: 2, kind: input, shape index: {}]
  %s3 = inlined_call_operand.hbm [shape: f32[64,192], index: 3, kind: input, shape index: {}]
  %s4 = inlined_call_operand.vmem [shape: f32[1,192], index: 4, kind: input, shape index: {}]
  %s5 = inlined_call_operand.hbm [shape: f32[64,128], index: 5, kind: input, shape index: {}]
  %s6 = inlined_call_operand.vmem [shape: f32[1,128], index: 6, kind: input, shape index: {}]
  %s7 = inlined_call_operand.hbm [shape: f32[8,128], index: 7, kind: output, shape index: {}]
  %s8 = sld [smem:[#allocation0]]
  $region58: #{tpu_custom_call.1} parent=0
    _
  %s10 = ssub.s32 1, %s8
  %s11 = scalar_select 0, %s10, %s8
  $region1: #{tpu_custom_call.1} parent=0
    #allocation3 [shape = 'u8[32768]{0}', space=vmem, size = 0x8000, scoped, tag = 'input window, operand 0, single buffered']
    #allocation4 [shape = 's32[1]{0}', space=sflag, size = 0x4, scoped, tag = 'scoped memory for tpu_custom_call.1']
    #allocation5 [shape = 's32[1]{0}', space=sflag, size = 0x4, scoped, tag = 'scoped memory for tpu_custom_call.1']
    #allocation6 [shape = 'u8[32768]{0}', space=vmem, size = 0x8000, scoped, tag = 'input window, operand 1, single buffered']
    #allocation7 [shape = 's32[1]{0}', space=sflag, size = 0x4, scoped, tag = 'scoped memory for tpu_custom_call.1']
    #allocation8 [shape = 'u8[1024]{0}', space=vmem, size = 0x400, scoped, tag = 'input window, operand 2, single buffered']
    #allocation9 [shape = 'u8[65536]{0}', space=vmem, size = 0x10000, scoped, tag = 'input window, operand 3, single buffered']
    #allocation10 [shape = 's32[1]{0}', space=sflag, size = 0x4, scoped, tag = 'scoped memory for tpu_custom_call.1']
    #allocation11 [shape = 'u8[32768]{0}', space=vmem, size = 0x8000, scoped, tag = 'input window, operand 5, single buffered']
    #allocation12 [shape = 'u8[4096]{0}', space=vmem, size = 0x1000, scoped, tag = 'output window, operand 0, single buffered']
    %12 = vsyncpa [#allocation4], 0
    %13 = vsyncpa [#allocation7], 0
    %14 = vsyncpa [#allocation10], 0
    %15 = vsyncpa [#allocation5], 0
    // Predicated region
    $region2: #{tpu_custom_call.1} parent=1 // pred_check
      _
    $region3: #{tpu_custom_call.1} parent=1 // pred_check_branch
      %17 = sbr.rel (0) target = $region5
    $region4: #{tpu_custom_call.1} parent=1 // pred_region
      %19 = vsyncadd [#allocation4], 0
      %s20 = sshll.u32 %s0, 4
      %s21 = int_to_ptr.hbm [resolvable:$true] %s20
      %s22 = sshll.u32 [#allocation3], 4
      %s23 = int_to_ptr.vmem [resolvable:$true] %s22
      %28 = dma.hbm_to_vmem [thread:$0]  %s21, 1024, %s23, [#allocation4], 128, 128, 8
    $region5: #{tpu_custom_call.1} parent=1 // pred_fallthru
      _
    // Predicated region
    $region6: #{tpu_custom_call.1} parent=1 // pred_check
      _
    $region7: #{tpu_custom_call.1} parent=1 // pred_check_branch
      %30 = sbr.rel (0) target = $region9
    $region8: #{tpu_custom_call.1} parent=1 // pred_region
      %32 = vsyncadd [#allocation7], 0
      %s33 = sshll.u32 %s1, 4
      %s34 = int_to_ptr.hbm [resolvable:$true] %s33
      %s35 = sshll.u32 [#allocation6], 4
      %s36 = int_to_ptr.vmem [resolvable:$true] %s35
      %41 = dma.hbm_to_vmem [thread:$0]  %s34, 1024, %s36, [#allocation7], 256, 256, 16
    $region9: #{tpu_custom_call.1} parent=1 // pred_fallthru
      _
    // Predicated region
    $region10: #{tpu_custom_call.1} parent=1 // pred_check
      _
    $region11: #{tpu_custom_call.1} parent=1 // pred_check_branch
      %43 = sbr.rel (0) target = $region13
    $region12: #{tpu_custom_call.1} parent=1 // pred_region
      %45 = vsyncadd [#allocation7], 0
      %s47 = sshll.u32 %s2, 4
      %s48 = int_to_ptr.hbm [resolvable:$true] %s47
      %s49 = sshll.u32 [#allocation8], 4
      %s50 = int_to_ptr.vmem [resolvable:$true] %s49
      %52 = dma.hbm_to_vmem [thread:$0]  %s48, 32, %s50, [#allocation7]
    $region13: #{tpu_custom_call.1} parent=1 // pred_fallthru
      _
    // Predicated region
    $region14: #{tpu_custom_call.1} parent=1 // pred_check
      _
    $region15: #{tpu_custom_call.1} parent=1 // pred_check_branch
      %54 = sbr.rel (0) target = $region17
    $region16: #{tpu_custom_call.1} parent=1 // pred_region
      %56 = vsyncadd [#allocation10], 0
      %s57 = sshll.u32 %s3, 4
      %s58 = int_to_ptr.hbm [resolvable:$true] %s57
      %s59 = sshll.u32 [#allocation9], 4
      %s60 = int_to_ptr.vmem [resolvable:$true] %s59
      %65 = dma.hbm_to_vmem [thread:$0]  %s58, 2048, %s60, [#allocation10], 256, 256, 16
    $region17: #{tpu_custom_call.1} parent=1 // pred_fallthru
      _
    // Predicated region
    $region18: #{tpu_custom_call.1} parent=1 // pred_check
      _
    $region19: #{tpu_custom_call.1} parent=1 // pred_check_branch
      %67 = sbr.rel (0) target = $region21
    $region20: #{tpu_custom_call.1} parent=1 // pred_region
      _
    $region21: #{tpu_custom_call.1} parent=1 // pred_fallthru
      _
    // Predicated region
    $region22: #{tpu_custom_call.1} parent=1 // pred_check
      _
    $region23: #{tpu_custom_call.1} parent=1 // pred_check_branch
      %69 = sbr.rel (0) target = $region25
    $region24: #{tpu_custom_call.1} parent=1 // pred_region
      %71 = vsyncadd [#allocation10], 0
      %s72 = sshll.u32 %s5, 4
      %s73 = int_to_ptr.hbm [resolvable:$true] %s72
      %s74 = sshll.u32 [#allocation11], 4
      %s75 = int_to_ptr.vmem [resolvable:$true] %s74
      %80 = dma.hbm_to_vmem [thread:$0]  %s73, 1024, %s75, [#allocation10], 128, 128, 8
    $region25: #{tpu_custom_call.1} parent=1 // pred_fallthru
      _
    // Predicated region
    $region26: #{tpu_custom_call.1} parent=1 // pred_check
      _
    $region27: #{tpu_custom_call.1} parent=1 // pred_check_branch
      %82 = sbr.rel (0) target = $region29
    $region28: #{tpu_custom_call.1} parent=1 // pred_region
      _
    $region29: #{tpu_custom_call.1} parent=1 // pred_fallthru
      _
    // Predicated region
    $region30: #{tpu_custom_call.1} parent=1 // pred_check
      _
    $region31: #{tpu_custom_call.1} parent=1 // pred_check_branch
      %84 = sbr.rel (0) target = $region33
    $region32: #{tpu_custom_call.1} parent=1 // pred_region
      %86 = dma.done [#allocation4], 1024
    $region33: #{tpu_custom_call.1} parent=1 // pred_fallthru
      _
    // Predicated region
    $region34: #{tpu_custom_call.1} parent=1 // pred_check
      _
    $region35: #{tpu_custom_call.1} parent=1 // pred_check_branch
      %88 = sbr.rel (0) target = $region37
    $region36: #{tpu_custom_call.1} parent=1 // pred_region
      %90 = dma.done [#allocation7], 1024
    $region37: #{tpu_custom_call.1} parent=1 // pred_fallthru
      _
    // Predicated region
    $region38: #{tpu_custom_call.1} parent=1 // pred_check
      _
    $region39: #{tpu_custom_call.1} parent=1 // pred_check_branch
      %92 = sbr.rel (0) target = $region41
    $region40: #{tpu_custom_call.1} parent=1 // pred_region
      %94 = dma.done [#allocation7], 32
    $region41: #{tpu_custom_call.1} parent=1 // pred_fallthru
      _
    // Predicated region
    $region42: #{tpu_custom_call.1} parent=1 // pred_check
      _
    $region43: #{tpu_custom_call.1} parent=1 // pred_check_branch
      %96 = sbr.rel (0) target = $region45
    $region44: #{tpu_custom_call.1} parent=1 // pred_region
      %98 = dma.done [#allocation10], 2048
    $region45: #{tpu_custom_call.1} parent=1 // pred_fallthru
      _
    // Predicated region
    $region46: #{tpu_custom_call.1} parent=1 // pred_check
      _
    $region47: #{tpu_custom_call.1} parent=1 // pred_check_branch
      %100 = sbr.rel (0) target = $region49
    $region48: #{tpu_custom_call.1} parent=1 // pred_region
      %102 = dma.done [#allocation10], 1024
    $region49: #{tpu_custom_call.1} parent=1 // pred_fallthru
      _
    %v103 = vld [vmem:[#allocation3] sm:$0xff]
    %v104 = vld [vmem:[#allocation3 + $0x8] sm:$0xff]
    %v105 = vld [vmem:[#allocation3 + $0x10] sm:$0xff]
    %v106 = vld [vmem:[#allocation3 + $0x18] sm:$0xff]
    %v107 = vld [vmem:[#allocation3 + $0x20] sm:$0xff]
    %v108 = vld [vmem:[#allocation3 + $0x28] sm:$0xff]
    %v109 = vld [vmem:[#allocation3 + $0x30] sm:$0xff]
    %v110 = vld [vmem:[#allocation3 + $0x38] sm:$0xff]
    %v111 = vld [vmem:[#allocation6] sm:$0xff]
    %v112 = vld [vmem:[#allocation6 + $0x8] sm:$0xff]
    %v113 = vld [vmem:[#allocation6 + $0x10] sm:$0xff]
    %v114 = vld [vmem:[#allocation6 + $0x18] sm:$0xff]
    %v115 = vld [vmem:[#allocation6 + $0x20] sm:$0xff]
    %v116 = vld [vmem:[#allocation6 + $0x28] sm:$0xff]
    %v117 = vld [vmem:[#allocation6 + $0x30] sm:$0xff]
    %v118 = vld [vmem:[#allocation6 + $0x38] sm:$0xff]
    %v119 = vld [vmem:[#allocation8] sm:$0x3]
    %v121 = vperm.slane %v119, 0
    %v122 = vperm.slane %v119, 1
    %vm125 = vcmask 261120
    %v127 = vsel %vm125, %v103, 0
    %v130 = vsel %vm125, %v104, 0
    %v133 = vsel %vm125, %v105, 0
    %v136 = vsel %vm125, %v106, 0
    %v139 = vsel %vm125, %v107, 0
    %v142 = vsel %vm125, %v108, 0
    %v145 = vsel %vm125, %v109, 0
    %v148 = vsel %vm125, %v110, 0
    %150 = vmatpush.msra.mxu0 0.0
    %151 = vmatpush.msra.mxu0 0.0
    %152 = vmatpush.msra.mxu0 0.0
    %153 = vmatpush.msra.mxu0 0.0
    %154 = vmatpush.msra.mxu0 0.0
    %155 = vmatpush.msra.mxu0 0.0
    %156 = vmatpush.msra.mxu0 0.0
    %157 = vmatpush.msra.mxu0 0.0
    %158 = vmatpush.msra.mxu0 0.0
    %159 = vmatpush.msra.mxu0 0.0
    %160 = vmatpush.msra.mxu0 0.0
    %161 = vmatpush.msra.mxu0 0.0
    %162 = vmatpush.msra.mxu0 %v117
    %163 = vmatpush.msra.mxu0 %v115
    %164 = vmatpush.msra.mxu0 %v113
    %165 = vmatpush.msra.mxu0 %v111
    %166 = vmatmul.f32.gmra.mxu0 %v127
    %v167 = vpop.f32.mrf.mxu0
    %v168 = vadd.f32 %v121, %v167
    %169 = vmatmul.f32.gmra.mxu0 %v130
    %v170 = vpop.f32.mrf.mxu0
    %v171 = vadd.f32 %v121, %v170
    %172 = vmatmul.f32.gmra.mxu0 %v133
    %v173 = vpop.f32.mrf.mxu0
    %v174 = vadd.f32 %v121, %v173
    %175 = vmatmul.f32.gmra.mxu0 %v136
    %v176 = vpop.f32.mrf.mxu0
    %v177 = vadd.f32 %v121, %v176
    %178 = vmatmul.f32.gmra.mxu0 %v139
    %v179 = vpop.f32.mrf.mxu0
    %v180 = vadd.f32 %v121, %v179
    %181 = vmatmul.f32.gmra.mxu0 %v142
    %v182 = vpop.f32.mrf.mxu0
    %v183 = vadd.f32 %v121, %v182
    %184 = vmatmul.f32.gmra.mxu0 %v145
    %v185 = vpop.f32.mrf.mxu0
    %v186 = vadd.f32 %v121, %v185
    %187 = vmatmul.f32.gmra.mxu0 %v148
    %v188 = vpop.f32.mrf.mxu0
    %v189 = vadd.f32 %v121, %v188
    %190 = vdwg.mxu0
    %191 = vmatpush.msra.mxu0 0.0
    %192 = vmatpush.msra.mxu0 0.0
    %193 = vmatpush.msra.mxu0 0.0
    %194 = vmatpush.msra.mxu0 0.0
    %195 = vmatpush.msra.mxu0 0.0
    %196 = vmatpush.msra.mxu0 0.0
    %197 = vmatpush.msra.mxu0 0.0
    %198 = vmatpush.msra.mxu0 0.0
    %199 = vmatpush.msra.mxu0 0.0
    %200 = vmatpush.msra.mxu0 0.0
    %201 = vmatpush.msra.mxu0 0.0
    %202 = vmatpush.msra.mxu0 0.0
    %203 = vmatpush.msra.mxu0 %v118
    %204 = vmatpush.msra.mxu0 %v116
    %205 = vmatpush.msra.mxu0 %v114
    %206 = vmatpush.msra.mxu0 %v112
    %207 = vmatmul.f32.gmra.mxu0 %v127
    %v208 = vpop.f32.mrf.mxu0
    %v209 = vadd.f32 %v122, %v208
    %210 = vmatmul.f32.gmra.mxu0 %v130
    %v211 = vpop.f32.mrf.mxu0
    %v212 = vadd.f32 %v122, %v211
    %213 = vmatmul.f32.gmra.mxu0 %v133
    %v214 = vpop.f32.mrf.mxu0
    %v215 = vadd.f32 %v122, %v214
    %216 = vmatmul.f32.gmra.mxu0 %v136
    %v217 = vpop.f32.mrf.mxu0
    %v218 = vadd.f32 %v122, %v217
    %219 = vmatmul.f32.gmra.mxu0 %v139
    %v220 = vpop.f32.mrf.mxu0
    %v221 = vadd.f32 %v122, %v220
    %222 = vmatmul.f32.gmra.mxu0 %v142
    %v223 = vpop.f32.mrf.mxu0
    %v224 = vadd.f32 %v122, %v223
    %225 = vmatmul.f32.gmra.mxu0 %v145
    %v226 = vpop.f32.mrf.mxu0
    %v227 = vadd.f32 %v122, %v226
    %228 = vmatmul.f32.gmra.mxu0 %v148
    %v229 = vpop.f32.mrf.mxu0
    %v230 = vadd.f32 %v122, %v229
    %231 = vdwg.mxu0
    %232 = vst [vmem:[#allocation2] sm:$0xff] %v168
    %vm233 = vcmask 523264
    %234 = vst.msk [vmem:[#allocation2 + $0x8] sm:$0xff] %vm233, %v209
    %235 = vst [vmem:[#allocation2 + $0x10] sm:$0xff] %v171
    %236 = vst.msk [vmem:[#allocation2 + $0x18] sm:$0xff] %vm233, %v212
    %237 = vst [vmem:[#allocation2 + $0x20] sm:$0xff] %v174
    %238 = vst.msk [vmem:[#allocation2 + $0x28] sm:$0xff] %vm233, %v215
    %239 = vst [vmem:[#allocation2 + $0x30] sm:$0xff] %v177
    %240 = vst.msk [vmem:[#allocation2 + $0x38] sm:$0xff] %vm233, %v218
    %241 = vst [vmem:[#allocation2 + $0x40] sm:$0xff] %v180
    %242 = vst.msk [vmem:[#allocation2 + $0x48] sm:$0xff] %vm233, %v221
    %243 = vst [vmem:[#allocation2 + $0x50] sm:$0xff] %v183
    %244 = vst.msk [vmem:[#allocation2 + $0x58] sm:$0xff] %vm233, %v224
    %245 = vst [vmem:[#allocation2 + $0x60] sm:$0xff] %v186
    %246 = vst.msk [vmem:[#allocation2 + $0x68] sm:$0xff] %vm233, %v227
    %247 = vst [vmem:[#allocation2 + $0x70] sm:$0xff] %v189
    %248 = vst.msk [vmem:[#allocation2 + $0x78] sm:$0xff] %vm233, %v230
    %v249 = vld [vmem:[#allocation9] sm:$0xff]
    %v250 = vld [vmem:[#allocation9 + $0x8] sm:$0xff]
    %v251 = vld [vmem:[#allocation9 + $0x10] sm:$0xff]
    %v252 = vld [vmem:[#allocation9 + $0x18] sm:$0xff]
    %v253 = vld [vmem:[#allocation9 + $0x20] sm:$0xff]
    %v254 = vld [vmem:[#allocation9 + $0x28] sm:$0xff]
    %v255 = vld [vmem:[#allocation9 + $0x30] sm:$0xff]
    %v256 = vld [vmem:[#allocation9 + $0x38] sm:$0xff]
    %v257 = vld [vmem:[#allocation9 + $0x40] sm:$0xff]
    %v258 = vld [vmem:[#allocation9 + $0x48] sm:$0xff]
    %v259 = vld [vmem:[#allocation9 + $0x50] sm:$0xff]
    %v260 = vld [vmem:[#allocation9 + $0x58] sm:$0xff]
    %v261 = vld [vmem:[#allocation9 + $0x60] sm:$0xff]
    %v262 = vld [vmem:[#allocation9 + $0x68] sm:$0xff]
    %v263 = vld [vmem:[#allocation9 + $0x70] sm:$0xff]
    %v264 = vld [vmem:[#allocation9 + $0x78] sm:$0xff]
    %v265 = vld [vmem:[%s4] sm:$0x3]
    %v267 = vperm.slane %v265, 0
    %v268 = vperm.slane %v265, 1
    %v272 = vsel %vm233, 0.0, 0
    %274 = vmatpush.msra.mxu0 0.0
    %275 = vmatpush.msra.mxu0 0.0
    %276 = vmatpush.msra.mxu0 0.0
    %277 = vmatpush.msra.mxu0 0.0
    %278 = vmatpush.msra.mxu0 0.0
    %279 = vmatpush.msra.mxu0 0.0
    %280 = vmatpush.msra.mxu0 0.0
    %281 = vmatpush.msra.mxu0 0.0
    %282 = vmatpush.msra.mxu0 %v263
    %283 = vmatpush.msra.mxu0 %v261
    %284 = vmatpush.msra.mxu0 %v259
    %285 = vmatpush.msra.mxu0 %v257
    %286 = vmatpush.msra.mxu0 %v255
    %287 = vmatpush.msra.mxu0 %v253
    %288 = vmatpush.msra.mxu0 %v251
    %289 = vmatpush.msra.mxu0 %v249
    %290 = vmatmul.f32.gmra.mxu0 %v272
    %v291 = vpop.f32.mrf.mxu0
    %v292 = vadd.f32 %v267, %v291
    %293 = vdwg.mxu0
    %294 = vmatpush.msra.mxu0 0.0
    %295 = vmatpush.msra.mxu0 0.0
    %296 = vmatpush.msra.mxu0 0.0
    %297 = vmatpush.msra.mxu0 0.0
    %298 = vmatpush.msra.mxu0 0.0
    %299 = vmatpush.msra.mxu0 0.0
    %300 = vmatpush.msra.mxu0 0.0
    %301 = vmatpush.msra.mxu0 0.0
    %302 = vmatpush.msra.mxu0 %v264
    %303 = vmatpush.msra.mxu0 %v262
    %304 = vmatpush.msra.mxu0 %v260
    %305 = vmatpush.msra.mxu0 %v258
    %306 = vmatpush.msra.mxu0 %v256
    %307 = vmatpush.msra.mxu0 %v254
    %308 = vmatpush.msra.mxu0 %v252
    %309 = vmatpush.msra.mxu0 %v250
    %310 = vmatmul.f32.gmra.mxu0 %v272
    %v311 = vpop.f32.mrf.mxu0
    %v312 = vadd.f32 %v268, %v311
    %313 = vdwg.mxu0
    %v314 = vld [vmem:[#allocation2] sm:$0xff]
    %v315 = vld [vmem:[#allocation2 + $0x8] sm:$0xff]
    %v316 = vadd.f32 %v314, %v292
    %v317 = vmul.f32 %v316, 0.5
    %v318 = vtanh.pop %v317
    %v319 = vadd.f32 %v318, 1.0
    %v320 = vmul.f32 %v319, 0.5
    %322 = vrot.lane.b32.xlu0 %v320, 96
    %v323 = vpop.permute.xlu0 %322
    %v325 = vsel %vm125, %v320, %v323
    %326 = vrot.lane.b32.xlu0 %v320, 64
    %v327 = vpop.permute.xlu0 %326
    %v329 = vsel %vm125, %v323, %v327
    %v330 = vmul.f32 %v325, %v312
    %v331 = vadd.f32 %v315, %v330
    %v332 = vtanh.pop %v331
    %v333 = vsub.f32 1.0, %v329
    %v334 = vmul.f32 %v333, %v332
    %v335 = vmul.f32 %v329, 0.0
    %v336 = vadd.f32 %v334, %v335
    %v338 = vsel %vm233, %v336, 0
    %340 = vmatpush.msra.mxu0 0.0
    %341 = vmatpush.msra.mxu0 0.0
    %342 = vmatpush.msra.mxu0 0.0
    %343 = vmatpush.msra.mxu0 0.0
    %344 = vmatpush.msra.mxu0 0.0
    %345 = vmatpush.msra.mxu0 0.0
    %346 = vmatpush.msra.mxu0 0.0
    %347 = vmatpush.msra.mxu0 0.0
    %348 = vmatpush.msra.mxu0 %v263
    %349 = vmatpush.msra.mxu0 %v261
    %350 = vmatpush.msra.mxu0 %v259
    %351 = vmatpush.msra.mxu0 %v257
    %352 = vmatpush.msra.mxu0 %v255
    %353 = vmatpush.msra.mxu0 %v253
    %354 = vmatpush.msra.mxu0 %v251
    %355 = vmatpush.msra.mxu0 %v249
    %356 = vmatmul.f32.gmra.mxu0 %v338
    %v357 = vpop.f32.mrf.mxu0
    %v358 = vadd.f32 %v267, %v357
    %359 = vdwg.mxu0
    %360 = vmatpush.msra.mxu0 0.0
    %361 = vmatpush.msra.mxu0 0.0
    %362 = vmatpush.msra.mxu0 0.0
    %363 = vmatpush.msra.mxu0 0.0
    %364 = vmatpush.msra.mxu0 0.0
    %365 = vmatpush.msra.mxu0 0.0
    %366 = vmatpush.msra.mxu0 0.0
    %367 = vmatpush.msra.mxu0 0.0
    %368 = vmatpush.msra.mxu0 %v264
    %369 = vmatpush.msra.mxu0 %v262
    %370 = vmatpush.msra.mxu0 %v260
    %371 = vmatpush.msra.mxu0 %v258
    %372 = vmatpush.msra.mxu0 %v256
    %373 = vmatpush.msra.mxu0 %v254
    %374 = vmatpush.msra.mxu0 %v252
    %375 = vmatpush.msra.mxu0 %v250
    %376 = vmatmul.f32.gmra.mxu0 %v338
    %v377 = vpop.f32.mrf.mxu0
    %v378 = vadd.f32 %v268, %v377
    %379 = vdwg.mxu0
    %s380 = scalar_lea.vmem [#allocation2], 16
    %v381 = vld [vmem:[%s380] sm:$0xff]
    %v382 = vld [vmem:[%s380 + $0x8] sm:$0xff]
    %v383 = vadd.f32 %v381, %v358
    %v384 = vmul.f32 %v383, 0.5
    %v385 = vtanh.pop %v384
    %v386 = vadd.f32 %v385, 1.0
    %v387 = vmul.f32 %v386, 0.5
    %389 = vrot.lane.b32.xlu0 %v387, 96
    %v390 = vpop.permute.xlu0 %389
    %v392 = vsel %vm125, %v387, %v390
    %393 = vrot.lane.b32.xlu0 %v387, 64
    %v394 = vpop.permute.xlu0 %393
    %v396 = vsel %vm125, %v390, %v394
    %v397 = vmul.f32 %v392, %v378
    %v398 = vadd.f32 %v382, %v397
    %v399 = vtanh.pop %v398
    %v400 = vsub.f32 1.0, %v396
    %v401 = vmul.f32 %v400, %v399
    %v402 = vmul.f32 %v396, %v336
    %v403 = vadd.f32 %v401, %v402
    %v405 = vsel %vm233, %v403, 0
    %407 = vmatpush.msra.mxu0 0.0
    %408 = vmatpush.msra.mxu0 0.0
    %409 = vmatpush.msra.mxu0 0.0
    %410 = vmatpush.msra.mxu0 0.0
    %411 = vmatpush.msra.mxu0 0.0
    %412 = vmatpush.msra.mxu0 0.0
    %413 = vmatpush.msra.mxu0 0.0
    %414 = vmatpush.msra.mxu0 0.0
    %415 = vmatpush.msra.mxu0 %v263
    %416 = vmatpush.msra.mxu0 %v261
    %417 = vmatpush.msra.mxu0 %v259
    %418 = vmatpush.msra.mxu0 %v257
    %419 = vmatpush.msra.mxu0 %v255
    %420 = vmatpush.msra.mxu0 %v253
    %421 = vmatpush.msra.mxu0 %v251
    %422 = vmatpush.msra.mxu0 %v249
    %423 = vmatmul.f32.gmra.mxu0 %v405
    %v424 = vpop.f32.mrf.mxu0
    %v425 = vadd.f32 %v267, %v424
    %426 = vdwg.mxu0
    %427 = vmatpush.msra.mxu0 0.0
    %428 = vmatpush.msra.mxu0 0.0
    %429 = vmatpush.msra.mxu0 0.0
    %430 = vmatpush.msra.mxu0 0.0
    %431 = vmatpush.msra.mxu0 0.0
    %432 = vmatpush.msra.mxu0 0.0
    %433 = vmatpush.msra.mxu0 0.0
    %434 = vmatpush.msra.mxu0 0.0
    %435 = vmatpush.msra.mxu0 %v264
    %436 = vmatpush.msra.mxu0 %v262
    %437 = vmatpush.msra.mxu0 %v260
    %438 = vmatpush.msra.mxu0 %v258
    %439 = vmatpush.msra.mxu0 %v256
    %440 = vmatpush.msra.mxu0 %v254
    %441 = vmatpush.msra.mxu0 %v252
    %442 = vmatpush.msra.mxu0 %v250
    %443 = vmatmul.f32.gmra.mxu0 %v405
    %v444 = vpop.f32.mrf.mxu0
    %v445 = vadd.f32 %v268, %v444
    %446 = vdwg.mxu0
    %s447 = scalar_lea.vmem [#allocation2], 32
    %v448 = vld [vmem:[%s447] sm:$0xff]
    %v449 = vld [vmem:[%s447 + $0x8] sm:$0xff]
    %v450 = vadd.f32 %v448, %v425
    %v451 = vmul.f32 %v450, 0.5
    %v452 = vtanh.pop %v451
    %v453 = vadd.f32 %v452, 1.0
    %v454 = vmul.f32 %v453, 0.5
    %456 = vrot.lane.b32.xlu0 %v454, 96
    %v457 = vpop.permute.xlu0 %456
    %v459 = vsel %vm125, %v454, %v457
    %460 = vrot.lane.b32.xlu0 %v454, 64
    %v461 = vpop.permute.xlu0 %460
    %v463 = vsel %vm125, %v457, %v461
    %v464 = vmul.f32 %v459, %v445
    %v465 = vadd.f32 %v449, %v464
    %v466 = vtanh.pop %v465
    %v467 = vsub.f32 1.0, %v463
    %v468 = vmul.f32 %v467, %v466
    %v469 = vmul.f32 %v463, %v403
    %v470 = vadd.f32 %v468, %v469
    %v472 = vsel %vm233, %v470, 0
    %474 = vmatpush.msra.mxu0 0.0
    %475 = vmatpush.msra.mxu0 0.0
    %476 = vmatpush.msra.mxu0 0.0
    %477 = vmatpush.msra.mxu0 0.0
    %478 = vmatpush.msra.mxu0 0.0
    %479 = vmatpush.msra.mxu0 0.0
    %480 = vmatpush.msra.mxu0 0.0
    %481 = vmatpush.msra.mxu0 0.0
    %482 = vmatpush.msra.mxu0 %v263
    %483 = vmatpush.msra.mxu0 %v261
    %484 = vmatpush.msra.mxu0 %v259
    %485 = vmatpush.msra.mxu0 %v257
    %486 = vmatpush.msra.mxu0 %v255
    %487 = vmatpush.msra.mxu0 %v253
    %488 = vmatpush.msra.mxu0 %v251
    %489 = vmatpush.msra.mxu0 %v249
    %490 = vmatmul.f32.gmra.mxu0 %v472
    %v491 = vpop.f32.mrf.mxu0
    %v492 = vadd.f32 %v267, %v491
    %493 = vdwg.mxu0
    %494 = vmatpush.msra.mxu0 0.0
    %495 = vmatpush.msra.mxu0 0.0
    %496 = vmatpush.msra.mxu0 0.0
    %497 = vmatpush.msra.mxu0 0.0
    %498 = vmatpush.msra.mxu0 0.0
    %499 = vmatpush.msra.mxu0 0.0
    %500 = vmatpush.msra.mxu0 0.0
    %501 = vmatpush.msra.mxu0 0.0
    %502 = vmatpush.msra.mxu0 %v264
    %503 = vmatpush.msra.mxu0 %v262
    %504 = vmatpush.msra.mxu0 %v260
    %505 = vmatpush.msra.mxu0 %v258
    %506 = vmatpush.msra.mxu0 %v256
    %507 = vmatpush.msra.mxu0 %v254
    %508 = vmatpush.msra.mxu0 %v252
    %509 = vmatpush.msra.mxu0 %v250
    %510 = vmatmul.f32.gmra.mxu0 %v472
    %v511 = vpop.f32.mrf.mxu0
    %v512 = vadd.f32 %v268, %v511
    %513 = vdwg.mxu0
    %s514 = scalar_lea.vmem [#allocation2], 48
    %v515 = vld [vmem:[%s514] sm:$0xff]
    %v516 = vld [vmem:[%s514 + $0x8] sm:$0xff]
    %v517 = vadd.f32 %v515, %v492
    %v518 = vmul.f32 %v517, 0.5
    %v519 = vtanh.pop %v518
    %v520 = vadd.f32 %v519, 1.0
    %v521 = vmul.f32 %v520, 0.5
    %523 = vrot.lane.b32.xlu0 %v521, 96
    %v524 = vpop.permute.xlu0 %523
    %v526 = vsel %vm125, %v521, %v524
    %527 = vrot.lane.b32.xlu0 %v521, 64
    %v528 = vpop.permute.xlu0 %527
    %v530 = vsel %vm125, %v524, %v528
    %v531 = vmul.f32 %v526, %v512
    %v532 = vadd.f32 %v516, %v531
    %v533 = vtanh.pop %v532
    %v534 = vsub.f32 1.0, %v530
    %v535 = vmul.f32 %v534, %v533
    %v536 = vmul.f32 %v530, %v470
    %v537 = vadd.f32 %v535, %v536
    %v539 = vsel %vm233, %v537, 0
    %541 = vmatpush.msra.mxu0 0.0
    %542 = vmatpush.msra.mxu0 0.0
    %543 = vmatpush.msra.mxu0 0.0
    %544 = vmatpush.msra.mxu0 0.0
    %545 = vmatpush.msra.mxu0 0.0
    %546 = vmatpush.msra.mxu0 0.0
    %547 = vmatpush.msra.mxu0 0.0
    %548 = vmatpush.msra.mxu0 0.0
    %549 = vmatpush.msra.mxu0 %v263
    %550 = vmatpush.msra.mxu0 %v261
    %551 = vmatpush.msra.mxu0 %v259
    %552 = vmatpush.msra.mxu0 %v257
    %553 = vmatpush.msra.mxu0 %v255
    %554 = vmatpush.msra.mxu0 %v253
    %555 = vmatpush.msra.mxu0 %v251
    %556 = vmatpush.msra.mxu0 %v249
    %557 = vmatmul.f32.gmra.mxu0 %v539
    %v558 = vpop.f32.mrf.mxu0
    %v559 = vadd.f32 %v267, %v558
    %560 = vdwg.mxu0
    %561 = vmatpush.msra.mxu0 0.0
    %562 = vmatpush.msra.mxu0 0.0
    %563 = vmatpush.msra.mxu0 0.0
    %564 = vmatpush.msra.mxu0 0.0
    %565 = vmatpush.msra.mxu0 0.0
    %566 = vmatpush.msra.mxu0 0.0
    %567 = vmatpush.msra.mxu0 0.0
    %568 = vmatpush.msra.mxu0 0.0
    %569 = vmatpush.msra.mxu0 %v264
    %570 = vmatpush.msra.mxu0 %v262
    %571 = vmatpush.msra.mxu0 %v260
    %572 = vmatpush.msra.mxu0 %v258
    %573 = vmatpush.msra.mxu0 %v256
    %574 = vmatpush.msra.mxu0 %v254
    %575 = vmatpush.msra.mxu0 %v252
    %576 = vmatpush.msra.mxu0 %v250
    %577 = vmatmul.f32.gmra.mxu0 %v539
    %v578 = vpop.f32.mrf.mxu0
    %v579 = vadd.f32 %v268, %v578
    %580 = vdwg.mxu0
    %s581 = scalar_lea.vmem [#allocation2], 64
    %v582 = vld [vmem:[%s581] sm:$0xff]
    %v583 = vld [vmem:[%s581 + $0x8] sm:$0xff]
    %v584 = vadd.f32 %v582, %v559
    %v585 = vmul.f32 %v584, 0.5
    %v586 = vtanh.pop %v585
    %v587 = vadd.f32 %v586, 1.0
    %v588 = vmul.f32 %v587, 0.5
    %590 = vrot.lane.b32.xlu0 %v588, 96
    %v591 = vpop.permute.xlu0 %590
    %v593 = vsel %vm125, %v588, %v591
    %594 = vrot.lane.b32.xlu0 %v588, 64
    %v595 = vpop.permute.xlu0 %594
    %v597 = vsel %vm125, %v591, %v595
    %v598 = vmul.f32 %v593, %v579
    %v599 = vadd.f32 %v583, %v598
    %v600 = vtanh.pop %v599
    %v601 = vsub.f32 1.0, %v597
    %v602 = vmul.f32 %v601, %v600
    %v603 = vmul.f32 %v597, %v537
    %v604 = vadd.f32 %v602, %v603
    %v606 = vsel %vm233, %v604, 0
    %608 = vmatpush.msra.mxu0 0.0
    %609 = vmatpush.msra.mxu0 0.0
    %610 = vmatpush.msra.mxu0 0.0
    %611 = vmatpush.msra.mxu0 0.0
    %612 = vmatpush.msra.mxu0 0.0
    %613 = vmatpush.msra.mxu0 0.0
    %614 = vmatpush.msra.mxu0 0.0
    %615 = vmatpush.msra.mxu0 0.0
    %616 = vmatpush.msra.mxu0 %v263
    %617 = vmatpush.msra.mxu0 %v261
    %618 = vmatpush.msra.mxu0 %v259
    %619 = vmatpush.msra.mxu0 %v257
    %620 = vmatpush.msra.mxu0 %v255
    %621 = vmatpush.msra.mxu0 %v253
    %622 = vmatpush.msra.mxu0 %v251
    %623 = vmatpush.msra.mxu0 %v249
    %624 = vmatmul.f32.gmra.mxu0 %v606
    %v625 = vpop.f32.mrf.mxu0
    %v626 = vadd.f32 %v267, %v625
    %627 = vdwg.mxu0
    %628 = vmatpush.msra.mxu0 0.0
    %629 = vmatpush.msra.mxu0 0.0
    %630 = vmatpush.msra.mxu0 0.0
    %631 = vmatpush.msra.mxu0 0.0
    %632 = vmatpush.msra.mxu0 0.0
    %633 = vmatpush.msra.mxu0 0.0
    %634 = vmatpush.msra.mxu0 0.0
    %635 = vmatpush.msra.mxu0 0.0
    %636 = vmatpush.msra.mxu0 %v264
    %637 = vmatpush.msra.mxu0 %v262
    %638 = vmatpush.msra.mxu0 %v260
    %639 = vmatpush.msra.mxu0 %v258
    %640 = vmatpush.msra.mxu0 %v256
    %641 = vmatpush.msra.mxu0 %v254
    %642 = vmatpush.msra.mxu0 %v252
    %643 = vmatpush.msra.mxu0 %v250
    %644 = vmatmul.f32.gmra.mxu0 %v606
    %v645 = vpop.f32.mrf.mxu0
    %v646 = vadd.f32 %v268, %v645
    %647 = vdwg.mxu0
    %s648 = scalar_lea.vmem [#allocation2], 80
    %v649 = vld [vmem:[%s648] sm:$0xff]
    %v650 = vld [vmem:[%s648 + $0x8] sm:$0xff]
    %v651 = vadd.f32 %v649, %v626
    %v652 = vmul.f32 %v651, 0.5
    %v653 = vtanh.pop %v652
    %v654 = vadd.f32 %v653, 1.0
    %v655 = vmul.f32 %v654, 0.5
    %657 = vrot.lane.b32.xlu0 %v655, 96
    %v658 = vpop.permute.xlu0 %657
    %v660 = vsel %vm125, %v655, %v658
    %661 = vrot.lane.b32.xlu0 %v655, 64
    %v662 = vpop.permute.xlu0 %661
    %v664 = vsel %vm125, %v658, %v662
    %v665 = vmul.f32 %v660, %v646
    %v666 = vadd.f32 %v650, %v665
    %v667 = vtanh.pop %v666
    %v668 = vsub.f32 1.0, %v664
    %v669 = vmul.f32 %v668, %v667
    %v670 = vmul.f32 %v664, %v604
    %v671 = vadd.f32 %v669, %v670
    %v673 = vsel %vm233, %v671, 0
    %675 = vmatpush.msra.mxu0 0.0
    %676 = vmatpush.msra.mxu0 0.0
    %677 = vmatpush.msra.mxu0 0.0
    %678 = vmatpush.msra.mxu0 0.0
    %679 = vmatpush.msra.mxu0 0.0
    %680 = vmatpush.msra.mxu0 0.0
    %681 = vmatpush.msra.mxu0 0.0
    %682 = vmatpush.msra.mxu0 0.0
    %683 = vmatpush.msra.mxu0 %v263
    %684 = vmatpush.msra.mxu0 %v261
    %685 = vmatpush.msra.mxu0 %v259
    %686 = vmatpush.msra.mxu0 %v257
    %687 = vmatpush.msra.mxu0 %v255
    %688 = vmatpush.msra.mxu0 %v253
    %689 = vmatpush.msra.mxu0 %v251
    %690 = vmatpush.msra.mxu0 %v249
    %691 = vmatmul.f32.gmra.mxu0 %v673
    %v692 = vpop.f32.mrf.mxu0
    %v693 = vadd.f32 %v267, %v692
    %694 = vdwg.mxu0
    %695 = vmatpush.msra.mxu0 0.0
    %696 = vmatpush.msra.mxu0 0.0
    %697 = vmatpush.msra.mxu0 0.0
    %698 = vmatpush.msra.mxu0 0.0
    %699 = vmatpush.msra.mxu0 0.0
    %700 = vmatpush.msra.mxu0 0.0
    %701 = vmatpush.msra.mxu0 0.0
    %702 = vmatpush.msra.mxu0 0.0
    %703 = vmatpush.msra.mxu0 %v264
    %704 = vmatpush.msra.mxu0 %v262
    %705 = vmatpush.msra.mxu0 %v260
    %706 = vmatpush.msra.mxu0 %v258
    %707 = vmatpush.msra.mxu0 %v256
    %708 = vmatpush.msra.mxu0 %v254
    %709 = vmatpush.msra.mxu0 %v252
    %710 = vmatpush.msra.mxu0 %v250
    %711 = vmatmul.f32.gmra.mxu0 %v673
    %v712 = vpop.f32.mrf.mxu0
    %v713 = vadd.f32 %v268, %v712
    %714 = vdwg.mxu0
    %s715 = scalar_lea.vmem [#allocation2], 96
    %v716 = vld [vmem:[%s715] sm:$0xff]
    %v717 = vld [vmem:[%s715 + $0x8] sm:$0xff]
    %v718 = vadd.f32 %v716, %v693
    %v719 = vmul.f32 %v718, 0.5
    %v720 = vtanh.pop %v719
    %v721 = vadd.f32 %v720, 1.0
    %v722 = vmul.f32 %v721, 0.5
    %724 = vrot.lane.b32.xlu0 %v722, 96
    %v725 = vpop.permute.xlu0 %724
    %v727 = vsel %vm125, %v722, %v725
    %728 = vrot.lane.b32.xlu0 %v722, 64
    %v729 = vpop.permute.xlu0 %728
    %v731 = vsel %vm125, %v725, %v729
    %v732 = vmul.f32 %v727, %v713
    %v733 = vadd.f32 %v717, %v732
    %v734 = vtanh.pop %v733
    %v735 = vsub.f32 1.0, %v731
    %v736 = vmul.f32 %v735, %v734
    %v737 = vmul.f32 %v731, %v671
    %v738 = vadd.f32 %v736, %v737
    %v740 = vsel %vm233, %v738, 0
    %742 = vmatpush.msra.mxu0 0.0
    %743 = vmatpush.msra.mxu0 0.0
    %744 = vmatpush.msra.mxu0 0.0
    %745 = vmatpush.msra.mxu0 0.0
    %746 = vmatpush.msra.mxu0 0.0
    %747 = vmatpush.msra.mxu0 0.0
    %748 = vmatpush.msra.mxu0 0.0
    %749 = vmatpush.msra.mxu0 0.0
    %750 = vmatpush.msra.mxu0 %v263
    %751 = vmatpush.msra.mxu0 %v261
    %752 = vmatpush.msra.mxu0 %v259
    %753 = vmatpush.msra.mxu0 %v257
    %754 = vmatpush.msra.mxu0 %v255
    %755 = vmatpush.msra.mxu0 %v253
    %756 = vmatpush.msra.mxu0 %v251
    %757 = vmatpush.msra.mxu0 %v249
    %758 = vmatmul.f32.gmra.mxu0 %v740
    %v759 = vpop.f32.mrf.mxu0
    %v760 = vadd.f32 %v267, %v759
    %761 = vdwg.mxu0
    %762 = vmatpush.msra.mxu0 0.0
    %763 = vmatpush.msra.mxu0 0.0
    %764 = vmatpush.msra.mxu0 0.0
    %765 = vmatpush.msra.mxu0 0.0
    %766 = vmatpush.msra.mxu0 0.0
    %767 = vmatpush.msra.mxu0 0.0
    %768 = vmatpush.msra.mxu0 0.0
    %769 = vmatpush.msra.mxu0 0.0
    %770 = vmatpush.msra.mxu0 %v264
    %771 = vmatpush.msra.mxu0 %v262
    %772 = vmatpush.msra.mxu0 %v260
    %773 = vmatpush.msra.mxu0 %v258
    %774 = vmatpush.msra.mxu0 %v256
    %775 = vmatpush.msra.mxu0 %v254
    %776 = vmatpush.msra.mxu0 %v252
    %777 = vmatpush.msra.mxu0 %v250
    %778 = vmatmul.f32.gmra.mxu0 %v740
    %v779 = vpop.f32.mrf.mxu0
    %v780 = vadd.f32 %v268, %v779
    %781 = vdwg.mxu0
    %s782 = scalar_lea.vmem [#allocation2], 112
    %v783 = vld [vmem:[%s782] sm:$0xff]
    %v784 = vld [vmem:[%s782 + $0x8] sm:$0xff]
    %v785 = vadd.f32 %v783, %v760
    %v786 = vmul.f32 %v785, 0.5
    %v787 = vtanh.pop %v786
    %v788 = vadd.f32 %v787, 1.0
    %v789 = vmul.f32 %v788, 0.5
    %791 = vrot.lane.b32.xlu0 %v789, 96
    %v792 = vpop.permute.xlu0 %791
    %v794 = vsel %vm125, %v789, %v792
    %795 = vrot.lane.b32.xlu0 %v789, 64
    %v796 = vpop.permute.xlu0 %795
    %v798 = vsel %vm125, %v792, %v796
    %v799 = vmul.f32 %v794, %v780
    %v800 = vadd.f32 %v784, %v799
    %v801 = vtanh.pop %v800
    %v802 = vsub.f32 1.0, %v798
    %v803 = vmul.f32 %v802, %v801
    %v804 = vmul.f32 %v798, %v738
    %v805 = vadd.f32 %v803, %v804
    %v806 = vld [vmem:[#allocation11] sm:$0xff]
    %v807 = vld [vmem:[#allocation11 + $0x8] sm:$0xff]
    %v808 = vld [vmem:[#allocation11 + $0x10] sm:$0xff]
    %v809 = vld [vmem:[#allocation11 + $0x18] sm:$0xff]
    %v810 = vld [vmem:[#allocation11 + $0x20] sm:$0xff]
    %v811 = vld [vmem:[#allocation11 + $0x28] sm:$0xff]
    %v812 = vld [vmem:[#allocation11 + $0x30] sm:$0xff]
    %v813 = vld [vmem:[#allocation11 + $0x38] sm:$0xff]
    %v814 = vld [vmem:[%s6] sm:$0x1]
    %v816 = vperm.slane %v814, 0
    %v819 = vsel %vm233, %v805, 0
    %821 = vmatpush.msra.mxu0 0.0
    %822 = vmatpush.msra.mxu0 0.0
    %823 = vmatpush.msra.mxu0 0.0
    %824 = vmatpush.msra.mxu0 0.0
    %825 = vmatpush.msra.mxu0 0.0
    %826 = vmatpush.msra.mxu0 0.0
    %827 = vmatpush.msra.mxu0 0.0
    %828 = vmatpush.msra.mxu0 0.0
    %829 = vmatpush.msra.mxu0 %v813
    %830 = vmatpush.msra.mxu0 %v812
    %831 = vmatpush.msra.mxu0 %v811
    %832 = vmatpush.msra.mxu0 %v810
    %833 = vmatpush.msra.mxu0 %v809
    %834 = vmatpush.msra.mxu0 %v808
    %835 = vmatpush.msra.mxu0 %v807
    %836 = vmatpush.msra.mxu0 %v806
    %837 = vmatmul.f32.gmra.mxu0 %v819
    %v838 = vpop.f32.mrf.mxu0
    %v839 = vadd.f32 %v816, %v838
    %840 = vdwg.mxu0
    %841 = vst [vmem:[#allocation12] sm:$0xff] %v839
    // Predicated region
    $region50: #{tpu_custom_call.1} parent=1 // pred_check
      _
    $region51: #{tpu_custom_call.1} parent=1 // pred_check_branch
      %843 = sbr.rel (0) target = $region53
    $region52: #{tpu_custom_call.1} parent=1 // pred_region
      %845 = vsyncadd [#allocation5], 0
      %s847 = sshll.u32 [#allocation12], 4
      %s848 = int_to_ptr.vmem [resolvable:$true] %s847
      %s849 = sshll.u32 %s7, 4
      %s850 = int_to_ptr.hbm [resolvable:$true] %s849
      %852 = dma.vmem_to_hbm [thread:$0]  %s848, 128, %s850, [#allocation5]
    $region53: #{tpu_custom_call.1} parent=1 // pred_fallthru
      _
    // Predicated region
    $region54: #{tpu_custom_call.1} parent=1 // pred_check
      _
    $region55: #{tpu_custom_call.1} parent=1 // pred_check_branch
      %854 = sbr.rel (0) target = $region57
    $region56: #{tpu_custom_call.1} parent=1 // pred_region
      %856 = dma.done [#allocation5], 128
    $region57: #{tpu_custom_call.1} parent=1 // pred_fallthru
      _
    %857 = vsyncpa [#allocation4], 1
    %858 = vsyncpa [#allocation7], 1
    %859 = vsyncpa [#allocation10], 1
    %860 = vsyncpa [#allocation5], 1

</llo_original>
